<compile_context>
chip_gen: v7x
topology: tpu7x:2x2x1
jax: 0.10.0
libtpu: 0.0.40
codegen_flags: <defaults>
</compile_context>

<pallas_src>
import math

import jax
import jax.numpy as jnp
from jax.experimental import pallas as pl
from jax.experimental.pallas import tpu as pltpu


def _round_up(x, m):
    return ((x + m - 1) // m) * m


# ---------------------------------------------------------------------------
# Fused kernel: one (batch, layer) grid step.
# ---------------------------------------------------------------------------

def _dncnn_fused_kernel(x_ref, w_ref, scale_ref, shift_ref, o_ref, act_ref):
    """One (batch, layer) grid step of the fused DnCNN.

    x_ref:     (1, H, W, 1)     input image block (consumed at layer 0 only)
    w_ref:     (1, 9*CP, CP)    this layer's weights, im2col (dy, dx, cin) rows
    scale_ref: (1, 1, CP)       folded conv-bias / BN scale
    shift_ref: (1, 1, CP)       folded conv-bias / BN shift
    o_ref:     (1, H, W, 1)     final output block (written at last layer)
    act_ref:   (H+2, W+2, CP)   VMEM-resident, spatially padded activation
    """
    l = pl.program_id(1)
    nlayers = pl.num_programs(1)
    Hp2, Wp2, CP = act_ref.shape
    H, W = Hp2 - 2, Wp2 - 2

    # Layer 0: zero the padded scratch (the halo then stays zero for every
    # layer) and deposit the single-channel image into channel 0 of the
    # interior. The input never touches HBM again after this.
    @pl.when(l == 0)
    def _():
        act_ref[...] = jnp.zeros_like(act_ref)
        act_ref[pl.ds(1, H), pl.ds(1, W), pl.ds(0, 1)] = x_ref[0]

    x = act_ref[...]                                        # (H+2, W+2, CP)

    # im2col: 9 shifted views concatenated along lanes -> one big-K matmul.
    patches = jnp.concatenate(
        [x[dy:dy + H, dx:dx + W, :].reshape(H * W, CP)
         for dy in range(3) for dx in range(3)],
        axis=-1)                                            # (H*W, 9*CP)

    acc = jnp.dot(patches, w_ref[0],
                  preferred_element_type=jnp.float32)       # (H*W, CP)
    acc = acc * scale_ref[0] + shift_ref[0]

    # All layers except the last: ReLU and write back into the scratch
    # interior (halo untouched -> stays zero).
    @pl.when(l < nlayers - 1)
    def _():
        act_ref[pl.ds(1, H), pl.ds(1, W), :] = (
            jnp.maximum(acc, 0.0).reshape(H, W, CP))

    # Last layer: no activation, extract the single real output channel.
    @pl.when(l == nlayers - 1)
    def _():
        o_ref[0] = acc.reshape(H, W, CP)[:, :, 0:1].astype(o_ref.dtype)


def dncnn_forward_fused(x_nchw, w_stack, scale_stack, shift_stack):
    """x_nchw: (N, 1, H, W) f32 -> (N, 1, H, W) f32."""
    N, cin, H, W = x_nchw.shape
    assert cin == 1, "DnCNN consumes single-channel images"
    L, K9, CP = w_stack.shape

    x_nhwc = jnp.transpose(x_nchw, (0, 2, 3, 1))            # (N, H, W, 1)

    out_nhwc = pl.pallas_call(
        _dncnn_fused_kernel,
        out_shape=jax.ShapeDtypeStruct((N, H, W, 1), jnp.float32),
        grid_spec=pltpu.PrefetchScalarGridSpec(
            num_scalar_prefetch=0,
            grid=(N, L),
            in_specs=[
                pl.BlockSpec((1, H, W, 1), lambda n, l: (n, 0, 0, 0)),
                pl.BlockSpec((1, K9, CP), lambda n, l: (l, 0, 0)),
                pl.BlockSpec((1, 1, CP), lambda n, l: (l, 0, 0)),
                pl.BlockSpec((1, 1, CP), lambda n, l: (l, 0, 0)),
            ],
            out_specs=pl.BlockSpec((1, H, W, 1), lambda n, l: (n, 0, 0, 0)),
            scratch_shapes=[pltpu.VMEM((H + 2, W + 2, CP), jnp.float32)],
        ),
        compiler_params=pltpu.CompilerParams(
            dimension_semantics=("parallel", "arbitrary")),
    )(x_nhwc, w_stack, scale_stack, shift_stack)

    return jnp.transpose(out_nhwc, (0, 3, 1, 2))            # NHWC -> NCHW


# ---------------------------------------------------------------------------
# Parameter construction (matches the PyTorch __init__ shapes / init scheme),
# channel-padded to CP lanes and pre-reshaped to the im2col weight layout.
# ---------------------------------------------------------------------------

def _xavier_uniform_hwio(key, cin, cout):
    fan_in = cin * 9
    fan_out = cout * 9
    bound = math.sqrt(6.0 / (fan_in + fan_out))
    return jax.random.uniform(key, (3, 3, cin, cout), jnp.float32,
                              minval=-bound, maxval=bound)


def build_dncnn_params(key, nlayers, features, enable_bias=True):
    """Returns (w_stack (L, 9*CP, CP), scale_stack (L,1,CP), shift_stack (L,1,CP))."""
    eps = 1e-5
    CP = max(128, _round_up(features, 128))

    keys = jax.random.split(key, nlayers + (nlayers - 2))
    ki = 0
    ws, scales, shifts = [], [], []

    def pad_w(w):
        cin, cout = w.shape[2], w.shape[3]
        return jnp.pad(w, ((0, 0), (0, 0), (0, CP - cin), (0, CP - cout)))

    def pad_c(v):
        return jnp.pad(v, (0, CP - v.shape[0]))

    # First layer: conv(1 -> F) + ReLU. Bias is zero-initialized by the torch
    # init, so enable_bias True/False produce identical values.
    w = _xavier_uniform_hwio(keys[ki], 1, features); ki += 1
    b = jnp.zeros((features,), jnp.float32)
    ws.append(pad_w(w))
    scales.append(pad_c(jnp.ones((features,), jnp.float32)))
    shifts.append(pad_c(b if enable_bias else jnp.zeros_like(b)))

    # Middle layers: conv(F -> F) + BN(F) + ReLU, BN folded into scale/shift.
    for _ in range(nlayers - 2):
        w = _xavier_uniform_hwio(keys[ki], features, features); ki += 1
        b = jnp.zeros((features,), jnp.float32)
        gamma = 0.02 * jax.random.normal(keys[ki], (features,), jnp.float32); ki += 1
        beta = jnp.zeros((features,), jnp.float32)
        running_mean = jnp.zeros((features,), jnp.float32)
        running_var = jnp.ones((features,), jnp.float32)
        bn_scale = gamma / jnp.sqrt(running_var + eps)
        shift = (b - running_mean) * bn_scale + beta
        ws.append(pad_w(w))
        scales.append(pad_c(bn_scale))
        shifts.append(pad_c(shift))

    # Last layer: conv(F -> 1), no activation.
    w = _xavier_uniform_hwio(keys[ki], features, 1); ki += 1
    b = jnp.zeros((1,), jnp.float32)
    ws.append(pad_w(w))
    scales.append(pad_c(jnp.ones((1,), jnp.float32)))
    shifts.append(pad_c(b))

    w_stack = jnp.stack(ws).reshape(nlayers, 9 * CP, CP)   # rows = (dy, dx, cin)
    scale_stack = jnp.stack(scales).reshape(nlayers, 1, CP)
    shift_stack = jnp.stack(shifts).reshape(nlayers, 1, CP)
    return w_stack, scale_stack, shift_stack


# ---------------------------------------------------------------------------
# Pure-JAX reference (for correctness checking against the fused kernel).
# ---------------------------------------------------------------------------

def dncnn_reference(x_nchw, w_stack, scale_stack, shift_stack):
    L, K9, CP = w_stack.shape
    w_hwio = w_stack.reshape(L, 3, 3, CP, CP)
    x = jnp.transpose(x_nchw, (0, 2, 3, 1))                 # (N, H, W, 1)
    x = jnp.pad(x, ((0, 0), (0, 0), (0, 0), (0, CP - 1)))   # channel-pad
    for l in range(L):
        y = jax.lax.conv_general_dilated(
            x, w_hwio[l], window_strides=(1, 1), padding="SAME",
            dimension_numbers=("NHWC", "HWIO", "NHWC"),
            precision=jax.lax.Precision.HIGHEST)
        y = y * scale_stack[l, 0] + shift_stack[l, 0]
        if l < L - 1:
            y = jnp.maximum(y, 0.0)
        x = y
    return jnp.transpose(x[..., 0:1], (0, 3, 1, 2))         # NHWC -> NCHW


if __name__ == "__main__":
    key = jax.random.PRNGKey(0)
    k_param, k_input = jax.random.split(key)

    # Small synthetic config (yaml params replaced by constants here).
    NLAYERS = 4
    FEATURES = 8

    w_stack, scale_stack, shift_stack = build_dncnn_params(
        k_param, NLAYERS, FEATURES, enable_bias=True)

    # DnCNN consumes single-channel images: NCHW = (2, 1, 16, 16).
    x = jax.random.normal(k_input, (2, 1, 16, 16), jnp.float32)

    out = dncnn_forward_fused(x, w_stack, scale_stack, shift_stack)
    out = jax.block_until_ready(out)
    assert out.shape == (2, 1, 16, 16), out.shape
    assert bool(jnp.all(jnp.isfinite(out)))

    ref = dncnn_reference(x, w_stack, scale_stack, shift_stack)
    ref = jax.block_until_ready(ref)
    assert bool(jnp.allclose(out, ref, rtol=2e-2, atol=1e-6)), (
        float(jnp.max(jnp.abs(out - ref))))

    # TODO(synk): forward ignores self.residual (the PyTorch forward does too).
    print("KERNEL_OK")
</pallas_src>

<mosaic_0001>
module attributes {stable_mosaic.version = 11 : i64} {
  func.func @_dncnn_fused_kernel(%arg0: i32, %arg1: i32, %arg2: memref<1x16x16x1xf32, #tpu.memory_space<vmem>>, %arg3: memref<1x1152x128xf32, #tpu.memory_space<vmem>>, %arg4: memref<1x1x128xf32, #tpu.memory_space<vmem>>, %arg5: memref<1x1x128xf32, #tpu.memory_space<vmem>>, %arg6: memref<1x16x16x1xf32, #tpu.memory_space<vmem>>, %arg7: memref<18x18x128xf32, #tpu.memory_space<vmem>>) attributes {dimension_semantics = [#tpu.dimension_semantics<parallel>, #tpu.dimension_semantics<arbitrary>], iteration_bounds = array<i64: 2, 4>, scalar_prefetch = 0 : i64, scratch_operands = 1 : i64, tpu.core_type = #tpu.core_type<tc>, window_params = [{transform_indices = @transform_0, window_bounds = array<i64: 1, 16, 16, 1>}, {transform_indices = @transform_1, window_bounds = array<i64: 1, 1152, 128>}, {transform_indices = @transform_2, window_bounds = array<i64: 1, 1, 128>}, {transform_indices = @transform_3, window_bounds = array<i64: 1, 1, 128>}, {transform_indices = @transform_4, window_bounds = array<i64: 1, 16, 16, 1>}]} {
    %c0_i32 = arith.constant 0 : i32
    %0 = arith.cmpi eq, %arg1, %c0_i32 : i32
    %1 = arith.extui %0 : i1 to i32
    %c0_i32_0 = arith.constant 0 : i32
    %2 = arith.cmpi ne, %1, %c0_i32_0 : i32
    scf.if %2 {
      %cst_15 = arith.constant 0.000000e+00 : f32
      %40 = vector.broadcast %cst_15 : f32 to vector<18x18x128xf32>
      %c0_16 = arith.constant 0 : index
      %c0_17 = arith.constant 0 : index
      %c0_18 = arith.constant 0 : index
      %41 = vector.load %arg7[%c0_16, %c0_17, %c0_18] : memref<18x18x128xf32, #tpu.memory_space<vmem>>, vector<18x18x128xf32>
      tpu.vector_store %arg7[%c0_16, %c0_17, %c0_18], %40 {strides = array<i32>} : memref<18x18x128xf32, #tpu.memory_space<vmem>>, vector<18x18x128xf32>,
      %c0_19 = arith.constant 0 : index
      %c0_20 = arith.constant 0 : index
      %c0_21 = arith.constant 0 : index
      %c0_22 = arith.constant 0 : index
      %42 = vector.load %arg2[%c0_19, %c0_20, %c0_21, %c0_22] : memref<1x16x16x1xf32, #tpu.memory_space<vmem>>, vector<1x16x16x1xf32>
      %43 = vector.shape_cast %42 : vector<1x16x16x1xf32> to vector<16x16x1xf32>
      %c1 = arith.constant 1 : index
      %c1_23 = arith.constant 1 : index
      %c0_24 = arith.constant 0 : index
      %44 = vector.load %arg7[%c1, %c1_23, %c0_24] : memref<18x18x128xf32, #tpu.memory_space<vmem>>, vector<16x16x1xf32>
      tpu.vector_store %arg7[%c1, %c1_23, %c0_24], %43 {strides = array<i32>} : memref<18x18x128xf32, #tpu.memory_space<vmem>>, vector<16x16x1xf32>,
    } else {
    }
    %c0 = arith.constant 0 : index
    %c0_1 = arith.constant 0 : index
    %c0_2 = arith.constant 0 : index
    %3 = vector.load %arg7[%c0, %c0_1, %c0_2] : memref<18x18x128xf32, #tpu.memory_space<vmem>>, vector<18x18x128xf32>
    %4 = vector.extract_strided_slice %3 {offsets = [0, 0, 0], sizes = [16, 16, 128], strides = [1, 1, 1]} : vector<18x18x128xf32> to vector<16x16x128xf32>
    %5 = vector.shape_cast %4 : vector<16x16x128xf32> to vector<256x128xf32>
    %6 = vector.extract_strided_slice %3 {offsets = [0, 1, 0], sizes = [16, 16, 128], strides = [1, 1, 1]} : vector<18x18x128xf32> to vector<16x16x128xf32>
    %7 = vector.shape_cast %6 : vector<16x16x128xf32> to vector<256x128xf32>
    %8 = vector.extract_strided_slice %3 {offsets = [0, 2, 0], sizes = [16, 16, 128], strides = [1, 1, 1]} : vector<18x18x128xf32> to vector<16x16x128xf32>
    %9 = vector.shape_cast %8 : vector<16x16x128xf32> to vector<256x128xf32>
    %10 = vector.extract_strided_slice %3 {offsets = [1, 0, 0], sizes = [16, 16, 128], strides = [1, 1, 1]} : vector<18x18x128xf32> to vector<16x16x128xf32>
    %11 = vector.shape_cast %10 : vector<16x16x128xf32> to vector<256x128xf32>
    %12 = vector.extract_strided_slice %3 {offsets = [1, 1, 0], sizes = [16, 16, 128], strides = [1, 1, 1]} : vector<18x18x128xf32> to vector<16x16x128xf32>
    %13 = vector.shape_cast %12 : vector<16x16x128xf32> to vector<256x128xf32>
    %14 = vector.extract_strided_slice %3 {offsets = [1, 2, 0], sizes = [16, 16, 128], strides = [1, 1, 1]} : vector<18x18x128xf32> to vector<16x16x128xf32>
    %15 = vector.shape_cast %14 : vector<16x16x128xf32> to vector<256x128xf32>
    %16 = vector.extract_strided_slice %3 {offsets = [2, 0, 0], sizes = [16, 16, 128], strides = [1, 1, 1]} : vector<18x18x128xf32> to vector<16x16x128xf32>
    %17 = vector.shape_cast %16 : vector<16x16x128xf32> to vector<256x128xf32>
    %18 = vector.extract_strided_slice %3 {offsets = [2, 1, 0], sizes = [16, 16, 128], strides = [1, 1, 1]} : vector<18x18x128xf32> to vector<16x16x128xf32>
    %19 = vector.shape_cast %18 : vector<16x16x128xf32> to vector<256x128xf32>
    %20 = vector.extract_strided_slice %3 {offsets = [2, 2, 0], sizes = [16, 16, 128], strides = [1, 1, 1]} : vector<18x18x128xf32> to vector<16x16x128xf32>
    %21 = vector.shape_cast %20 : vector<16x16x128xf32> to vector<256x128xf32>
    %22 = tpu.concatenate %5, %7, %9, %11, %13, %15, %17, %19, %21 in 1 : vector<256x128xf32>, vector<256x128xf32>, vector<256x128xf32>, vector<256x128xf32>, vector<256x128xf32>, vector<256x128xf32>, vector<256x128xf32>, vector<256x128xf32>, vector<256x128xf32> -> vector<256x1152xf32>
    %c0_3 = arith.constant 0 : index
    %c0_4 = arith.constant 0 : index
    %c0_5 = arith.constant 0 : index
    %23 = vector.load %arg3[%c0_3, %c0_4, %c0_5] : memref<1x1152x128xf32, #tpu.memory_space<vmem>>, vector<1x1152x128xf32>
    %24 = vector.shape_cast %23 : vector<1x1152x128xf32> to vector<1152x128xf32>
    %cst = arith.constant dense<0.000000e+00> : vector<256x128xf32>
    %25 = tpu.matmul %22, %24, %cst {dimension_numbers = #tpu.dot_dimension_numbers<[1], [0], [0], [1], [0, 0, 1, 1], [], []>} : vector<256x1152xf32>, vector<1152x128xf32>, vector<256x128xf32> -> vector<256x128xf32>
    %c0_6 = arith.constant 0 : index
    %c0_7 = arith.constant 0 : index
    %c0_8 = arith.constant 0 : index
    %26 = vector.load %arg4[%c0_6, %c0_7, %c0_8] : memref<1x1x128xf32, #tpu.memory_space<vmem>>, vector<1x1x128xf32>
    %27 = vector.shape_cast %26 : vector<1x1x128xf32> to vector<1x128xf32>
    %28 = vector.broadcast %27 : vector<1x128xf32> to vector<256x128xf32>
    %29 = arith.mulf %25, %28 : vector<256x128xf32>
    %c0_9 = arith.constant 0 : index
    %c0_10 = arith.constant 0 : index
    %c0_11 = arith.constant 0 : index
    %30 = vector.load %arg5[%c0_9, %c0_10, %c0_11] : memref<1x1x128xf32, #tpu.memory_space<vmem>>, vector<1x1x128xf32>
    %31 = vector.shape_cast %30 : vector<1x1x128xf32> to vector<1x128xf32>
    %32 = vector.broadcast %31 : vector<1x128xf32> to vector<256x128xf32>
    %33 = arith.addf %29, %32 : vector<256x128xf32>
    %c3_i32 = arith.constant 3 : i32
    %34 = arith.cmpi slt, %arg1, %c3_i32 : i32
    %35 = arith.extui %34 : i1 to i32
    %c0_i32_12 = arith.constant 0 : i32
    %36 = arith.cmpi ne, %35, %c0_i32_12 : i32
    scf.if %36 {
      %cst_15 = arith.constant 0.000000e+00 : f32
      %40 = vector.broadcast %cst_15 : f32 to vector<256x128xf32>
      %41 = arith.maximumf %33, %40 : vector<256x128xf32>
      %42 = vector.shape_cast %41 : vector<256x128xf32> to vector<16x16x128xf32>
      %c1 = arith.constant 1 : index
      %c1_16 = arith.constant 1 : index
      %c0_17 = arith.constant 0 : index
      %43 = vector.load %arg7[%c1, %c1_16, %c0_17] : memref<18x18x128xf32, #tpu.memory_space<vmem>>, vector<16x16x128xf32>
      tpu.vector_store %arg7[%c1, %c1_16, %c0_17], %42 {strides = array<i32>} : memref<18x18x128xf32, #tpu.memory_space<vmem>>, vector<16x16x128xf32>,
    } else {
    }
    %c3_i32_13 = arith.constant 3 : i32
    %37 = arith.cmpi eq, %arg1, %c3_i32_13 : i32
    %38 = arith.extui %37 : i1 to i32
    %c0_i32_14 = arith.constant 0 : i32
    %39 = arith.cmpi ne, %38, %c0_i32_14 : i32
    scf.if %39 {
      %40 = vector.shape_cast %33 : vector<256x128xf32> to vector<16x16x128xf32>
      %41 = vector.extract_strided_slice %40 {offsets = [0, 0, 0], sizes = [16, 16, 1], strides = [1, 1, 1]} : vector<16x16x128xf32> to vector<16x16x1xf32>
      %c0_15 = arith.constant 0 : index
      %c0_16 = arith.constant 0 : index
      %c0_17 = arith.constant 0 : index
      %c0_18 = arith.constant 0 : index
      %42 = vector.load %arg6[%c0_15, %c0_16, %c0_17, %c0_18] : memref<1x16x16x1xf32, #tpu.memory_space<vmem>>, vector<1x16x16x1xf32>
      %43 = vector.shape_cast %42 : vector<1x16x16x1xf32> to vector<16x16x1xf32>
      %44 = vector.shape_cast %41 : vector<16x16x1xf32> to vector<1x16x16x1xf32>
      tpu.vector_store %arg6[%c0_15, %c0_16, %c0_17, %c0_18], %44 {strides = array<i32>} : memref<1x16x16x1xf32, #tpu.memory_space<vmem>>, vector<1x16x16x1xf32>,
    } else {
    }
    return
  }
  func.func @transform_0(%arg0: i32, %arg1: i32) -> (i32, i32, i32, i32) {
    %c0_i32 = arith.constant 0 : i32
    %c0_i32_0 = arith.constant 0 : i32
    %c0_i32_1 = arith.constant 0 : i32
    %c0_i32_2 = arith.constant 0 : i32
    return %arg0, %c0_i32, %c0_i32_0, %c0_i32_1 : i32, i32, i32, i32
  }
  func.func @transform_1(%arg0: i32, %arg1: i32) -> (i32, i32, i32) {
    %c0_i32 = arith.constant 0 : i32
    %c0_i32_0 = arith.constant 0 : i32
    %c0_i32_1 = arith.constant 0 : i32
    return %arg1, %c0_i32, %c0_i32_0 : i32, i32, i32
  }
  func.func @transform_2(%arg0: i32, %arg1: i32) -> (i32, i32, i32) {
    %c0_i32 = arith.constant 0 : i32
    %c0_i32_0 = arith.constant 0 : i32
    %c0_i32_1 = arith.constant 0 : i32
    return %arg1, %c0_i32, %c0_i32_0 : i32, i32, i32
  }
  func.func @transform_3(%arg0: i32, %arg1: i32) -> (i32, i32, i32) {
    %c0_i32 = arith.constant 0 : i32
    %c0_i32_0 = arith.constant 0 : i32
    %c0_i32_1 = arith.constant 0 : i32
    return %arg1, %c0_i32, %c0_i32_0 : i32, i32, i32
  }
  func.func @transform_4(%arg0: i32, %arg1: i32) -> (i32, i32, i32, i32) {
    %c0_i32 = arith.constant 0 : i32
    %c0_i32_0 = arith.constant 0 : i32
    %c0_i32_1 = arith.constant 0 : i32
    %c0_i32_2 = arith.constant 0 : i32
    return %arg0, %c0_i32, %c0_i32_0, %c0_i32_1 : i32, i32, i32, i32
  }
}

</mosaic_0001>

<llo_original>
// kernel: tpu_custom_call.1
$region0: #{tpu_custom_call.1}
  #allocation0 [shape = 'u32[]', space=smem, size = 0x4, offset = 0x4, fixed_abs, tag = 'smem constant byte address 0x4 - core index']
  #allocation1 [shape = 'u32[144,128]{1,0:T(1,128)}', space=vmem, size = 0x12000, scoped, tag = 'internal scratch']
  #allocation2 [shape = 'f32[18,18,128]{2,1,0:T(8,128)}', space=vmem, size = 0x36000, scoped, tag = 'scratch operand']
  %s0 = inlined_call_operand.vmem [shape: f32[2,16,16,1], index: 0, kind: input, shape index: {}]
  %s1 = inlined_call_operand.hbm [shape: f32[4,1152,128], index: 1, kind: input, shape index: {}]
  %s2 = inlined_call_operand.hbm [shape: f32[4,1,128], index: 2, kind: input, shape index: {}]
  %s3 = inlined_call_operand.hbm [shape: f32[4,1,128], index: 3, kind: input, shape index: {}]
  %s4 = inlined_call_operand.vmem [shape: f32[2,16,16,1], index: 4, kind: output, shape index: {}]
  %s5 = sld [smem:[#allocation0]]
  $region73: #{tpu_custom_call.1} parent=0
    _
  %s7 = ssub.s32 1, %s5
  %s8 = scalar_select 0, %s7, %s5
  $region1: #{tpu_custom_call.1} parent=0
    #allocation3 [shape = 'u8[1179648]{0}', space=vmem, size = 0x120000, scoped, tag = 'input window, operand 1']
    #allocation4 [shape = 's32[2]{0}', space=sflag, size = 0x8, scoped, tag = 'scoped memory for tpu_custom_call.1']
    #allocation5 [shape = 'u8[1024]{0}', space=vmem, size = 0x400, scoped, tag = 'input window, operand 2']
    #allocation6 [shape = 's32[2]{0}', space=sflag, size = 0x8, scoped, tag = 'scoped memory for tpu_custom_call.1']
    #allocation7 [shape = 'u8[1024]{0}', space=vmem, size = 0x400, scoped, tag = 'input window, operand 3']
    %9 = vsyncpa [#allocation4], 0
    %s10 = scalar_lea.sflag [#allocation4], 1
    %11 = vsyncpa %s10, 0
    %12 = vsyncpa [#allocation6], 0
    %s13 = scalar_lea.sflag [#allocation6], 1
    %14 = vsyncpa %s13, 0
    loop: start=0, step=1, limit=10
    $region2: #{tpu_custom_call.1} parent=1 // loop_pre_header
      _
    $region3: #{tpu_custom_call.1} parent=1 // loop_header
      %s16 = sphi 0, %s20
      %p17 = scmp.ge.s32.totalorder %s16, 10
      %s23 = sphi 0, %s35
      %s24 = sphi 0, %s31
      %s25 = sphi 0, %s23
      %s26 = sphi 0, %s24
      %s27 = sphi 0, %s25
      %s28 = sphi 0, %s26
      %s38 = sphi 0, %s40
      %s41 = sphi 0, %s38
      %s42 = sphi 0, %s41
      %s58 = sphi 0, %s42
      %s64 = sphi 0, %s66
      %s67 = sphi 0, %s64
      %s68 = sphi 0, %s67
      %s84 = sphi 0, %s68
      %s90 = sphi 0, %s92
      %s93 = sphi 0, %s90
      %s94 = sphi 0, %s93
      %s110 = sphi 0, %s94
      %s116 = sphi 0, %s118
      %s119 = sphi 0, %s116
      %s120 = sphi 0, %s119
      %s136 = sphi 0, %s120
      %s142 = sphi 0, %s144
      %s145 = sphi 0, %s142
      %s146 = sphi 0, %s145
      %s162 = sphi 0, %s146
    $region4: #{tpu_custom_call.1} parent=1 // loop_header_branch
      %19 = sbr.rel (%p17) target = $region8
    $region5: #{tpu_custom_call.1} parent=1 // loop_body
      %s21 = ssub.s32 %s16, 1
      %s22 = ssub.s32 %s16, 2
      %s29 = sadd.s32 1, %s24
      %p30 = scmp.ge.s32.totalorder %s29, 4
      %s31 = scalar_select %p30, 0, %s29
      %s32 = sadd.s32 1, %s23
      %s33 = scalar_select %p30, %s32, %s23
      %p34 = scmp.ge.s32.totalorder %s33, 2
      %s35 = scalar_select %p34, 0, %s33
      %s36 = ssub.s32 %s23, %s35
      %p37 = scmp.eq.s32.totalorder %s36, 0
      %s39 = sadd.s32 %s38, 1
      %s40 = scalar_select %p37, %s38, %s39
      %p43 = pneg %p37
      %p44 = scmp.eq.s32.totalorder %s16, 7
      %p45 = por %p43, %p44
      %p46 = scmp.ne.s32.totalorder %s38, %s41
      %p47 = scmp.eq.s32.totalorder %s16, 0
      %p48 = por %p46, %p47
      %p49 = scmp.ne.s32.totalorder %s38, %s41
      %p50 = scmp.eq.s32.totalorder %s21, 7
      %p51 = por %p49, %p50
      %p52 = scmp.ne.s32.totalorder %s41, %s42
      %p53 = scmp.eq.s32.totalorder %s21, 0
      %p54 = por %p52, %p53
      %p55 = scmp.ne.s32.totalorder %s41, %s42
      %p56 = scmp.eq.s32.totalorder %s22, 7
      %p57 = por %p55, %p56
      %p59 = scmp.ne.s32.totalorder %s42, %s58
      %p60 = scmp.eq.s32.totalorder %s22, 0
      %p61 = por %p59, %p60
      %s62 = ssub.s32 %s24, %s31
      %p63 = scmp.eq.s32.totalorder %s62, 0
      %s65 = sadd.s32 %s64, 1
      %s66 = scalar_select %p63, %s64, %s65
      %p69 = pneg %p63
      %p70 = scmp.eq.s32.totalorder %s16, 7
      %p71 = por %p69, %p70
      %p72 = scmp.ne.s32.totalorder %s64, %s67
      %p73 = scmp.eq.s32.totalorder %s16, 0
      %p74 = por %p72, %p73
      %p75 = scmp.ne.s32.totalorder %s64, %s67
      %p76 = scmp.eq.s32.totalorder %s21, 7
      %p77 = por %p75, %p76
      %p78 = scmp.ne.s32.totalorder %s67, %s68
      %p79 = scmp.eq.s32.totalorder %s21, 0
      %p80 = por %p78, %p79
      %p81 = scmp.ne.s32.totalorder %s67, %s68
      %p82 = scmp.eq.s32.totalorder %s22, 7
      %p83 = por %p81, %p82
      %p85 = scmp.ne.s32.totalorder %s68, %s84
      %p86 = scmp.eq.s32.totalorder %s22, 0
      %p87 = por %p85, %p86
      %s88 = ssub.s32 %s24, %s31
      %p89 = scmp.eq.s32.totalorder %s88, 0
      %s91 = sadd.s32 %s90, 1
      %s92 = scalar_select %p89, %s90, %s91
      %p95 = pneg %p89
      %p96 = scmp.eq.s32.totalorder %s16, 7
      %p97 = por %p95, %p96
      %p98 = scmp.ne.s32.totalorder %s90, %s93
      %p99 = scmp.eq.s32.totalorder %s16, 0
      %p100 = por %p98, %p99
      %p101 = scmp.ne.s32.totalorder %s90, %s93
      %p102 = scmp.eq.s32.totalorder %s21, 7
      %p103 = por %p101, %p102
      %p104 = scmp.ne.s32.totalorder %s93, %s94
      %p105 = scmp.eq.s32.totalorder %s21, 0
      %p106 = por %p104, %p105
      %p107 = scmp.ne.s32.totalorder %s93, %s94
      %p108 = scmp.eq.s32.totalorder %s22, 7
      %p109 = por %p107, %p108
      %p111 = scmp.ne.s32.totalorder %s94, %s110
      %p112 = scmp.eq.s32.totalorder %s22, 0
      %p113 = por %p111, %p112
      %s114 = ssub.s32 %s24, %s31
      %p115 = scmp.eq.s32.totalorder %s114, 0
      %s117 = sadd.s32 %s116, 1
      %s118 = scalar_select %p115, %s116, %s117
      %p121 = pneg %p115
      %p122 = scmp.eq.s32.totalorder %s16, 7
      %p123 = por %p121, %p122
      %p124 = scmp.ne.s32.totalorder %s116, %s119
      %p125 = scmp.eq.s32.totalorder %s16, 0
      %p126 = por %p124, %p125
      %p127 = scmp.ne.s32.totalorder %s116, %s119
      %p128 = scmp.eq.s32.totalorder %s21, 7
      %p129 = por %p127, %p128
      %p130 = scmp.ne.s32.totalorder %s119, %s120
      %p131 = scmp.eq.s32.totalorder %s21, 0
      %p132 = por %p130, %p131
      %p133 = scmp.ne.s32.totalorder %s119, %s120
      %p134 = scmp.eq.s32.totalorder %s22, 7
      %p135 = por %p133, %p134
      %p137 = scmp.ne.s32.totalorder %s120, %s136
      %p138 = scmp.eq.s32.totalorder %s22, 0
      %p139 = por %p137, %p138
      %s140 = ssub.s32 %s23, %s35
      %p141 = scmp.eq.s32.totalorder %s140, 0
      %s143 = sadd.s32 %s142, 1
      %s144 = scalar_select %p141, %s142, %s143
      %p147 = pneg %p141
      %p148 = scmp.eq.s32.totalorder %s16, 7
      %p149 = por %p147, %p148
      %p150 = scmp.ne.s32.totalorder %s142, %s145
      %p151 = scmp.eq.s32.totalorder %s16, 0
      %p152 = por %p150, %p151
      %p153 = scmp.ne.s32.totalorder %s142, %s145
      %p154 = scmp.eq.s32.totalorder %s21, 7
      %p155 = por %p153, %p154
      %p156 = scmp.ne.s32.totalorder %s145, %s146
      %p157 = scmp.eq.s32.totalorder %s21, 0
      %p158 = por %p156, %p157
      %p159 = scmp.ne.s32.totalorder %s145, %s146
      %p160 = scmp.eq.s32.totalorder %s22, 7
      %p161 = por %p159, %p160
      %p163 = scmp.ne.s32.totalorder %s146, %s162
      %p164 = scmp.eq.s32.totalorder %s22, 0
      %p165 = por %p163, %p164
      %p166 = scmp.le.s32.totalorder 1, %s16
      %p167 = scmp.lt.s32.totalorder %s16, 9
      %p168 = pnand %p166, %p167
      %p169 = pneg %p168
      // Predicated region
      $region9: #{tpu_custom_call.1} parent=5 // pred_check
        _
      $region10: #{tpu_custom_call.1} parent=5 // pred_check_branch
        %171 = sbr.rel (%p168) target = $region12
      $region11: #{tpu_custom_call.1} parent=5 // pred_region
        %s172 = ssub.s32 %s16, 1
      $region12: #{tpu_custom_call.1} parent=5 // pred_fallthru
        _
      %p173 = scmp.lt.s32.totalorder %s16, 8
      // Predicated region
      $region13: #{tpu_custom_call.1} parent=5 // pred_check
        %p174 = pneg %p173
      $region14: #{tpu_custom_call.1} parent=5 // pred_check_branch
        %176 = sbr.rel (%p174) target = $region16
      $region15: #{tpu_custom_call.1} parent=5 // pred_region
        // Predicated region
        $region17: #{tpu_custom_call.1} parent=15 // pred_check
          %p177 = pneg %p48
        $region18: #{tpu_custom_call.1} parent=15 // pred_check_branch
          %179 = sbr.rel (%p177) target = $region20
        $region19: #{tpu_custom_call.1} parent=15 // pred_region
          %p180 = scmp.lt.s32.totalorder %s23, 1
          %s181 = scalar_select %p180, %s23, 1
          %s182 = smul.addr %s181, 32
          %s183 = smul.addr %s182, 8
          %s184 = scalar_lea.vmem %s0, %s183
        $region20: #{tpu_custom_call.1} parent=15 // pred_fallthru
          _
        // Predicated region
        $region21: #{tpu_custom_call.1} parent=15 // pred_check
          %p185 = pneg %p74
        $region22: #{tpu_custom_call.1} parent=15 // pred_check_branch
          %187 = sbr.rel (%p185) target = $region24
        $region23: #{tpu_custom_call.1} parent=15 // pred_region
          %s188 = sand.u32 %s64, 1
          %s189 = scalar_lea.sflag [#allocation4], %s188
          %s190 = sand.u32 %s64, 1
          %s191 = smul.addr %s190, 1152
          %s192 = scalar_lea.vmem [#allocation3], %s191
          %s194 = ssub.s32 18432, 18432
          %195 = vsyncadd %s189, %s194
          %s196 = smul.addr %s24, 144
          %s197 = smul.addr %s196, 128
          %s198 = scalar_lea.hbm %s1, %s197
          %s199 = sshll.u32 %s192, 4
          %s200 = int_to_ptr.vmem [resolvable:$true] %s199
          %205 = dma.hbm_to_vmem [thread:$0]  %s198, 18432, %s200, %s189, 128, 128, 8
        $region24: #{tpu_custom_call.1} parent=15 // pred_fallthru
          _
        // Predicated region
        $region25: #{tpu_custom_call.1} parent=15 // pred_check
          %p206 = pneg %p100
        $region26: #{tpu_custom_call.1} parent=15 // pred_check_branch
          %208 = sbr.rel (%p206) target = $region28
        $region27: #{tpu_custom_call.1} parent=15 // pred_region
          %s209 = sand.u32 %s16, 1
          %s210 = scalar_lea.sflag [#allocation6], %s209
          %s211 = sand.u32 %s90, 1
          %s212 = scalar_lea.vmem [#allocation5], %s211
          %s214 = ssub.s32 16, 16
          %215 = vsyncadd %s210, %s214
          %s216 = smul.addr %s24, 16
          %s217 = scalar_lea.hbm %s2, %s216
          %s219 = sshll.u32 %s212, 4
          %s220 = int_to_ptr.vmem [resolvable:$true] %s219
          %222 = dma.hbm_to_vmem [thread:$0]  %s217, 16, %s220, %s210
        $region28: #{tpu_custom_call.1} parent=15 // pred_fallthru
          _
        // Predicated region
        $region29: #{tpu_custom_call.1} parent=15 // pred_check
          %p223 = pneg %p126
        $region30: #{tpu_custom_call.1} parent=15 // pred_check_branch
          %225 = sbr.rel (%p223) target = $region32
        $region31: #{tpu_custom_call.1} parent=15 // pred_region
          %s226 = sand.u32 %s16, 1
          %s227 = scalar_lea.sflag [#allocation6], %s226
          %s228 = sand.u32 %s116, 1
          %s229 = scalar_lea.vmem [#allocation7], %s228
          %s231 = ssub.s32 16, 16
          %232 = vsyncadd %s227, %s231
          %s233 = smul.addr %s24, 16
          %s234 = scalar_lea.hbm %s3, %s233
          %s236 = sshll.u32 %s229, 4
          %s237 = int_to_ptr.vmem [resolvable:$true] %s236
          %239 = dma.hbm_to_vmem [thread:$0]  %s234, 16, %s237, %s227
        $region32: #{tpu_custom_call.1} parent=15 // pred_fallthru
          _
      $region16: #{tpu_custom_call.1} parent=5 // pred_fallthru
        _
      %p240 = scmp.le.s32.totalorder 1, %s16
      %p241 = scmp.lt.s32.totalorder %s16, 9
      %p242 = pnand %p240, %p241
      %p243 = pneg %p242
      // Predicated region
      $region33: #{tpu_custom_call.1} parent=5 // pred_check
        _
      $region34: #{tpu_custom_call.1} parent=5 // pred_check_branch
        %245 = sbr.rel (%p242) target = $region36
      $region35: #{tpu_custom_call.1} parent=5 // pred_region
        %s246 = ssub.s32 %s16, 1
        %s247 = sand.u32 %s67, 1
        %s248 = scalar_lea.sflag [#allocation4], %s247
        %s249 = sand.u32 %s67, 1
        %s250 = smul.addr %s249, 1152
        %s251 = scalar_lea.vmem [#allocation3], %s250
        // Predicated region
        $region37: #{tpu_custom_call.1} parent=35 // pred_check
          %p252 = pneg %p80
        $region38: #{tpu_custom_call.1} parent=35 // pred_check_branch
          %254 = sbr.rel (%p252) target = $region40
        $region39: #{tpu_custom_call.1} parent=35 // pred_region
          %255 = dma.done %s248, 18432
        $region40: #{tpu_custom_call.1} parent=35 // pred_fallthru
          _
        %s256 = sand.u32 %s21, 1
        %s257 = scalar_lea.sflag [#allocation6], %s256
        %s258 = sand.u32 %s93, 1
        %s259 = scalar_lea.vmem [#allocation5], %s258
        // Predicated region
        $region41: #{tpu_custom_call.1} parent=35 // pred_check
          %p260 = pneg %p106
        $region42: #{tpu_custom_call.1} parent=35 // pred_check_branch
          %262 = sbr.rel (%p260) target = $region44
        $region43: #{tpu_custom_call.1} parent=35 // pred_region
          %263 = dma.done %s257, 16
        $region44: #{tpu_custom_call.1} parent=35 // pred_fallthru
          _
        %s264 = sand.u32 %s21, 1
        %s265 = scalar_lea.sflag [#allocation6], %s264
        %s266 = sand.u32 %s119, 1
        %s267 = scalar_lea.vmem [#allocation7], %s266
        // Predicated region
        $region45: #{tpu_custom_call.1} parent=35 // pred_check
          %p268 = pneg %p132
        $region46: #{tpu_custom_call.1} parent=35 // pred_check_branch
          %270 = sbr.rel (%p268) target = $region48
        $region47: #{tpu_custom_call.1} parent=35 // pred_region
          %271 = dma.done %s265, 16
        $region48: #{tpu_custom_call.1} parent=35 // pred_fallthru
          _
        %p272 = scmp.lt.s32.totalorder %s25, 1
        %s273 = scalar_select %p272, %s25, 1
        %s274 = smul.addr %s273, 32
        %s275 = smul.addr %s274, 8
        %s276 = scalar_lea.vmem %s0, %s275
        %p277 = pneg %p54
        %p278 = pneg %p51
        %s279 = sand.u32 %s67, 1
        %s280 = scalar_lea.sflag [#allocation4], %s279
        %s281 = sand.u32 %s67, 1
        %s282 = smul.addr %s281, 1152
        %s283 = scalar_lea.vmem [#allocation3], %s282
        %p284 = pneg %p80
        %p285 = pneg %p77
        %s286 = sand.u32 %s21, 1
        %s287 = scalar_lea.sflag [#allocation6], %s286
        %s288 = sand.u32 %s93, 1
        %s289 = scalar_lea.vmem [#allocation5], %s288
        %p290 = pneg %p106
        %p291 = pneg %p103
        %s292 = sand.u32 %s21, 1
        %s293 = scalar_lea.sflag [#allocation6], %s292
        %s294 = sand.u32 %s119, 1
        %s295 = scalar_lea.vmem [#allocation7], %s294
        %p296 = pneg %p132
        %p297 = pneg %p129
        %p298 = pneg %p158
        %p299 = pneg %p155
        %p300 = scmp.lt.s32.totalorder %s25, 1
        %s301 = scalar_select %p300, %s25, 1
        %s302 = smul.addr %s301, 32
        %s303 = smul.addr %s302, 8
        %s304 = scalar_lea.vmem %s4, %s303
        %p305 = scmp.lt.s32.totalorder %s25, 1
        %s306 = scalar_select %p305, %s25, 1
        %s307 = smul.addr %s306, 32
        %s308 = smul.addr %s307, 8
        %s309 = scalar_lea.vmem %s0, %s308
        %p310 = scmp.lt.s32.totalorder %s25, 1
        %s311 = scalar_select %p310, %s25, 1
        %s312 = smul.addr %s311, 32
        %s313 = smul.addr %s312, 8
        %s314 = scalar_lea.vmem %s4, %s313
        %p315 = scmp.eq.s32.totalorder %s26, 0
        // Predicated region
        $region49: #{tpu_custom_call.1} parent=35 // pred_check
          %p316 = pneg %p315
        $region50: #{tpu_custom_call.1} parent=35 // pred_check_branch
          %318 = sbr.rel (%p316) target = $region52
        $region51: #{tpu_custom_call.1} parent=35 // pred_region
          %319 = vst [vmem:[#allocation2] sm:$0xff] 0.0
          %320 = vst [vmem:[#allocation2 + $0x8] sm:$0xff] 0.0
          %321 = vst [vmem:[#allocation2 + $0x10] sm:$0x3] 0.0
          %322 = vst [vmem:[#allocation2 + $0x18] sm:$0xff] 0.0
          %323 = vst [vmem:[#allocation2 + $0x20] sm:$0xff] 0.0
          %324 = vst [vmem:[#allocation2 + $0x28] sm:$0x3] 0.0
          %325 = vst [vmem:[#allocation2 + $0x30] sm:$0xff] 0.0
          %326 = vst [vmem:[#allocation2 + $0x38] sm:$0xff] 0.0
          %327 = vst [vmem:[#allocation2 + $0x40] sm:$0x3] 0.0
          %328 = vst [vmem:[#allocation2 + $0x48] sm:$0xff] 0.0
          %329 = vst [vmem:[#allocation2 + $0x50] sm:$0xff] 0.0
          %330 = vst [vmem:[#allocation2 + $0x58] sm:$0x3] 0.0
          %331 = vst [vmem:[#allocation2 + $0x60] sm:$0xff] 0.0
          %332 = vst [vmem:[#allocation2 + $0x68] sm:$0xff] 0.0
          %333 = vst [vmem:[#allocation2 + $0x70] sm:$0x3] 0.0
          %334 = vst [vmem:[#allocation2 + $0x78] sm:$0xff] 0.0
          %335 = vst [vmem:[#allocation2 + $0x80] sm:$0xff] 0.0
          %336 = vst [vmem:[#allocation2 + $0x88] sm:$0x3] 0.0
          %337 = vst [vmem:[#allocation2 + $0x90] sm:$0xff] 0.0
          %338 = vst [vmem:[#allocation2 + $0x98] sm:$0xff] 0.0
          %339 = vst [vmem:[#allocation2 + $0xa0] sm:$0x3] 0.0
          %340 = vst [vmem:[#allocation2 + $0xa8] sm:$0xff] 0.0
          %341 = vst [vmem:[#allocation2 + $0xb0] sm:$0xff] 0.0
          %342 = vst [vmem:[#allocation2 + $0xb8] sm:$0x3] 0.0
          %343 = vst [vmem:[#allocation2 + $0xc0] sm:$0xff] 0.0
          %344 = vst [vmem:[#allocation2 + $0xc8] sm:$0xff] 0.0
          %345 = vst [vmem:[#allocation2 + $0xd0] sm:$0x3] 0.0
          %346 = vst [vmem:[#allocation2 + $0xd8] sm:$0xff] 0.0
          %347 = vst [vmem:[#allocation2 + $0xe0] sm:$0xff] 0.0
          %348 = vst [vmem:[#allocation2 + $0xe8] sm:$0x3] 0.0
          %349 = vst [vmem:[#allocation2 + $0xf0] sm:$0xff] 0.0
          %350 = vst [vmem:[#allocation2 + $0xf8] sm:$0xff] 0.0
          %351 = vst [vmem:[#allocation2 + $0x100] sm:$0x3] 0.0
          %352 = vst [vmem:[#allocation2 + $0x108] sm:$0xff] 0.0
          %353 = vst [vmem:[#allocation2 + $0x110] sm:$0xff] 0.0
          %354 = vst [vmem:[#allocation2 + $0x118] sm:$0x3] 0.0
          %355 = vst [vmem:[#allocation2 + $0x120] sm:$0xff] 0.0
          %356 = vst [vmem:[#allocation2 + $0x128] sm:$0xff] 0.0
          %357 = vst [vmem:[#allocation2 + $0x130] sm:$0x3] 0.0
          %358 = vst [vmem:[#allocation2 + $0x138] sm:$0xff] 0.0
          %359 = vst [vmem:[#allocation2 + $0x140] sm:$0xff] 0.0
          %360 = vst [vmem:[#allocation2 + $0x148] sm:$0x3] 0.0
          %361 = vst [vmem:[#allocation2 + $0x150] sm:$0xff] 0.0
          %362 = vst [vmem:[#allocation2 + $0x158] sm:$0xff] 0.0
          %363 = vst [vmem:[#allocation2 + $0x160] sm:$0x3] 0.0
          %364 = vst [vmem:[#allocation2 + $0x168] sm:$0xff] 0.0
          %365 = vst [vmem:[#allocation2 + $0x170] sm:$0xff] 0.0
          %366 = vst [vmem:[#allocation2 + $0x178] sm:$0x3] 0.0
          %367 = vst [vmem:[#allocation2 + $0x180] sm:$0xff] 0.0
          %368 = vst [vmem:[#allocation2 + $0x188] sm:$0xff] 0.0
          %369 = vst [vmem:[#allocation2 + $0x190] sm:$0x3] 0.0
          %370 = vst [vmem:[#allocation2 + $0x198] sm:$0xff] 0.0
          %371 = vst [vmem:[#allocation2 + $0x1a0] sm:$0xff] 0.0
          %372 = vst [vmem:[#allocation2 + $0x1a8] sm:$0x3] 0.0
          %v373 = vld [vmem:[%s309] sm:$0xff]
          %v374 = vld [vmem:[%s309 + $0x8] sm:$0xff]
          %v375 = vld [vmem:[%s309 + $0x10] sm:$0xff]
          %v376 = vld [vmem:[%s309 + $0x18] sm:$0xff]
          %v377 = vld [vmem:[%s309 + $0x20] sm:$0xff]
          %v378 = vld [vmem:[%s309 + $0x28] sm:$0xff]
          %v379 = vld [vmem:[%s309 + $0x30] sm:$0xff]
          %v380 = vld [vmem:[%s309 + $0x38] sm:$0xff]
          %v381 = vld [vmem:[%s309 + $0x40] sm:$0xff]
          %v382 = vld [vmem:[%s309 + $0x48] sm:$0xff]
          %v383 = vld [vmem:[%s309 + $0x50] sm:$0xff]
          %v384 = vld [vmem:[%s309 + $0x58] sm:$0xff]
          %v385 = vld [vmem:[%s309 + $0x60] sm:$0xff]
          %v386 = vld [vmem:[%s309 + $0x68] sm:$0xff]
          %v387 = vld [vmem:[%s309 + $0x70] sm:$0xff]
          %v388 = vld [vmem:[%s309 + $0x78] sm:$0xff]
          %v389 = vld [vmem:[%s309 + $0x80] sm:$0xff]
          %v390 = vld [vmem:[%s309 + $0x88] sm:$0xff]
          %v391 = vld [vmem:[%s309 + $0x90] sm:$0xff]
          %v392 = vld [vmem:[%s309 + $0x98] sm:$0xff]
          %v393 = vld [vmem:[%s309 + $0xa0] sm:$0xff]
          %v394 = vld [vmem:[%s309 + $0xa8] sm:$0xff]
          %v395 = vld [vmem:[%s309 + $0xb0] sm:$0xff]
          %v396 = vld [vmem:[%s309 + $0xb8] sm:$0xff]
          %v397 = vld [vmem:[%s309 + $0xc0] sm:$0xff]
          %v398 = vld [vmem:[%s309 + $0xc8] sm:$0xff]
          %v399 = vld [vmem:[%s309 + $0xd0] sm:$0xff]
          %v400 = vld [vmem:[%s309 + $0xd8] sm:$0xff]
          %v401 = vld [vmem:[%s309 + $0xe0] sm:$0xff]
          %v402 = vld [vmem:[%s309 + $0xe8] sm:$0xff]
          %v403 = vld [vmem:[%s309 + $0xf0] sm:$0xff]
          %v404 = vld [vmem:[%s309 + $0xf8] sm:$0xff]
          %s405 = scalar_lea.vmem [#allocation2], 24
          %vm406 = vcmask 7168
          %407 = vst.msk [vmem:[%s405 + $0x1] sm:$0xff] %vm406, %v373
          %408 = vst.msk [vmem:[%s405 + $0x9] sm:$0xff] %vm406, %v374
          %409 = vst.msk [vmem:[%s405 + $0x19] sm:$0xff] %vm406, %v375
          %410 = vst.msk [vmem:[%s405 + $0x21] sm:$0xff] %vm406, %v376
          %411 = vst.msk [vmem:[%s405 + $0x31] sm:$0xff] %vm406, %v377
          %412 = vst.msk [vmem:[%s405 + $0x39] sm:$0xff] %vm406, %v378
          %413 = vst.msk [vmem:[%s405 + $0x49] sm:$0xff] %vm406, %v379
          %414 = vst.msk [vmem:[%s405 + $0x51] sm:$0xff] %vm406, %v380
          %415 = vst.msk [vmem:[%s405 + $0x61] sm:$0xff] %vm406, %v381
          %416 = vst.msk [vmem:[%s405 + $0x69] sm:$0xff] %vm406, %v382
          %417 = vst.msk [vmem:[%s405 + $0x79] sm:$0xff] %vm406, %v383
          %418 = vst.msk [vmem:[%s405 + $0x81] sm:$0xff] %vm406, %v384
          %419 = vst.msk [vmem:[%s405 + $0x91] sm:$0xff] %vm406, %v385
          %420 = vst.msk [vmem:[%s405 + $0x99] sm:$0xff] %vm406, %v386
          %421 = vst.msk [vmem:[%s405 + $0xa9] sm:$0xff] %vm406, %v387
          %422 = vst.msk [vmem:[%s405 + $0xb1] sm:$0xff] %vm406, %v388
          %423 = vst.msk [vmem:[%s405 + $0xc1] sm:$0xff] %vm406, %v389
          %424 = vst.msk [vmem:[%s405 + $0xc9] sm:$0xff] %vm406, %v390
          %425 = vst.msk [vmem:[%s405 + $0xd9] sm:$0xff] %vm406, %v391
          %426 = vst.msk [vmem:[%s405 + $0xe1] sm:$0xff] %vm406, %v392
          %427 = vst.msk [vmem:[%s405 + $0xf1] sm:$0xff] %vm406, %v393
          %428 = vst.msk [vmem:[%s405 + $0xf9] sm:$0xff] %vm406, %v394
          %429 = vst.msk [vmem:[%s405 + $0x109] sm:$0xff] %vm406, %v395
          %430 = vst.msk [vmem:[%s405 + $0x111] sm:$0xff] %vm406, %v396
          %431 = vst.msk [vmem:[%s405 + $0x121] sm:$0xff] %vm406, %v397
          %432 = vst.msk [vmem:[%s405 + $0x129] sm:$0xff] %vm406, %v398
          %433 = vst.msk [vmem:[%s405 + $0x139] sm:$0xff] %vm406, %v399
          %434 = vst.msk [vmem:[%s405 + $0x141] sm:$0xff] %vm406, %v400
          %435 = vst.msk [vmem:[%s405 + $0x151] sm:$0xff] %vm406, %v401
          %436 = vst.msk [vmem:[%s405 + $0x159] sm:$0xff] %vm406, %v402
          %437 = vst.msk [vmem:[%s405 + $0x169] sm:$0xff] %vm406, %v403
          %438 = vst.msk [vmem:[%s405 + $0x171] sm:$0xff] %vm406, %v404
        $region52: #{tpu_custom_call.1} parent=35 // pred_fallthru
          _
        %v439 = vld [vmem:[#allocation2] sm:$0xff]
        %v440 = vld [vmem:[#allocation2 + $0x8] sm:$0xff]
        %v441 = vld [vmem:[#allocation2 + $0x10] sm:$0x3]
        %v442 = vld [vmem:[#allocation2 + $0x18] sm:$0xff]
        %v443 = vld [vmem:[#allocation2 + $0x20] sm:$0xff]
        %v444 = vld [vmem:[#allocation2 + $0x28] sm:$0x3]
        %v445 = vld [vmem:[#allocation2 + $0x30] sm:$0xff]
        %v446 = vld [vmem:[#allocation2 + $0x38] sm:$0xff]
        %v447 = vld [vmem:[#allocation2 + $0x40] sm:$0x3]
        %v448 = vld [vmem:[#allocation2 + $0x48] sm:$0xff]
        %v449 = vld [vmem:[#allocation2 + $0x50] sm:$0xff]
        %v450 = vld [vmem:[#allocation2 + $0x58] sm:$0x3]
        %v451 = vld [vmem:[#allocation2 + $0x60] sm:$0xff]
        %v452 = vld [vmem:[#allocation2 + $0x68] sm:$0xff]
        %v453 = vld [vmem:[#allocation2 + $0x70] sm:$0x3]
        %v454 = vld [vmem:[#allocation2 + $0x78] sm:$0xff]
        %v455 = vld [vmem:[#allocation2 + $0x80] sm:$0xff]
        %v456 = vld [vmem:[#allocation2 + $0x88] sm:$0x3]
        %v457 = vld [vmem:[#allocation2 + $0x90] sm:$0xff]
        %v458 = vld [vmem:[#allocation2 + $0x98] sm:$0xff]
        %v459 = vld [vmem:[#allocation2 + $0xa0] sm:$0x3]
        %v460 = vld [vmem:[#allocation2 + $0xa8] sm:$0xff]
        %v461 = vld [vmem:[#allocation2 + $0xb0] sm:$0xff]
        %v462 = vld [vmem:[#allocation2 + $0xb8] sm:$0x3]
        %v463 = vld [vmem:[#allocation2 + $0xc0] sm:$0xff]
        %v464 = vld [vmem:[#allocation2 + $0xc8] sm:$0xff]
        %v465 = vld [vmem:[#allocation2 + $0xd0] sm:$0x3]
        %v466 = vld [vmem:[#allocation2 + $0xd8] sm:$0xff]
        %v467 = vld [vmem:[#allocation2 + $0xe0] sm:$0xff]
        %v468 = vld [vmem:[#allocation2 + $0xe8] sm:$0x3]
        %v469 = vld [vmem:[#allocation2 + $0xf0] sm:$0xff]
        %v470 = vld [vmem:[#allocation2 + $0xf8] sm:$0xff]
        %v471 = vld [vmem:[#allocation2 + $0x100] sm:$0x3]
        %v472 = vld [vmem:[#allocation2 + $0x108] sm:$0xff]
        %v473 = vld [vmem:[#allocation2 + $0x110] sm:$0xff]
        %v474 = vld [vmem:[#allocation2 + $0x118] sm:$0x3]
        %v475 = vld [vmem:[#allocation2 + $0x120] sm:$0xff]
        %v476 = vld [vmem:[#allocation2 + $0x128] sm:$0xff]
        %v477 = vld [vmem:[#allocation2 + $0x130] sm:$0x3]
        %v478 = vld [vmem:[#allocation2 + $0x138] sm:$0xff]
        %v479 = vld [vmem:[#allocation2 + $0x140] sm:$0xff]
        %v480 = vld [vmem:[#allocation2 + $0x148] sm:$0x3]
        %v481 = vld [vmem:[#allocation2 + $0x150] sm:$0xff]
        %v482 = vld [vmem:[#allocation2 + $0x158] sm:$0xff]
        %v483 = vld [vmem:[#allocation2 + $0x160] sm:$0x3]
        %v484 = vld [vmem:[#allocation2 + $0x168] sm:$0xff]
        %v485 = vld [vmem:[#allocation2 + $0x170] sm:$0xff]
        %v486 = vld [vmem:[#allocation2 + $0x178] sm:$0x3]
        %v487 = vld [vmem:[#allocation2 + $0x180] sm:$0xff]
        %v488 = vld [vmem:[#allocation2 + $0x188] sm:$0xff]
        %v489 = vld [vmem:[#allocation2 + $0x190] sm:$0x3]
        %v490 = vld [vmem:[#allocation2 + $0x198] sm:$0xff]
        %v491 = vld [vmem:[#allocation2 + $0x1a0] sm:$0xff]
        %v492 = vld [vmem:[#allocation2 + $0x1a8] sm:$0x3]
        %vm541 = vcmask 1046528
        %v542 = vrot.slane %v439, 1
        %v543 = vrot.slane %v440, 1
        %v544 = vsel %vm541, %v542, %v543
        %v545 = vrot.slane %v441, 1
        %v546 = vsel %vm541, %v543, %v545
        %v547 = vrot.slane %v442, 1
        %v548 = vrot.slane %v443, 1
        %v549 = vsel %vm541, %v547, %v548
        %v550 = vrot.slane %v444, 1
        %v551 = vsel %vm541, %v548, %v550
        %v552 = vrot.slane %v445, 1
        %v553 = vrot.slane %v446, 1
        %v554 = vsel %vm541, %v552, %v553
        %v555 = vrot.slane %v447, 1
        %v556 = vsel %vm541, %v553, %v555
        %v557 = vrot.slane %v448, 1
        %v558 = vrot.slane %v449, 1
        %v559 = vsel %vm541, %v557, %v558
        %v560 = vrot.slane %v450, 1
        %v561 = vsel %vm541, %v558, %v560
        %v562 = vrot.slane %v451, 1
        %v563 = vrot.slane %v452, 1
        %v564 = vsel %vm541, %v562, %v563
        %v565 = vrot.slane %v453, 1
        %v566 = vsel %vm541, %v563, %v565
        %v567 = vrot.slane %v454, 1
        %v568 = vrot.slane %v455, 1
        %v569 = vsel %vm541, %v567, %v568
        %v570 = vrot.slane %v456, 1
        %v571 = vsel %vm541, %v568, %v570
        %v572 = vrot.slane %v457, 1
        %v573 = vrot.slane %v458, 1
        %v574 = vsel %vm541, %v572, %v573
        %v575 = vrot.slane %v459, 1
        %v576 = vsel %vm541, %v573, %v575
        %v577 = vrot.slane %v460, 1
        %v578 = vrot.slane %v461, 1
        %v579 = vsel %vm541, %v577, %v578
        %v580 = vrot.slane %v462, 1
        %v581 = vsel %vm541, %v578, %v580
        %v582 = vrot.slane %v463, 1
        %v583 = vrot.slane %v464, 1
        %v584 = vsel %vm541, %v582, %v583
        %v585 = vrot.slane %v465, 1
        %v586 = vsel %vm541, %v583, %v585
        %v587 = vrot.slane %v466, 1
        %v588 = vrot.slane %v467, 1
        %v589 = vsel %vm541, %v587, %v588
        %v590 = vrot.slane %v468, 1
        %v591 = vsel %vm541, %v588, %v590
        %v592 = vrot.slane %v469, 1
        %v593 = vrot.slane %v470, 1
        %v594 = vsel %vm541, %v592, %v593
        %v595 = vrot.slane %v471, 1
        %v596 = vsel %vm541, %v593, %v595
        %v597 = vrot.slane %v472, 1
        %v598 = vrot.slane %v473, 1
        %v599 = vsel %vm541, %v597, %v598
        %v600 = vrot.slane %v474, 1
        %v601 = vsel %vm541, %v598, %v600
        %v602 = vrot.slane %v475, 1
        %v603 = vrot.slane %v476, 1
        %v604 = vsel %vm541, %v602, %v603
        %v605 = vrot.slane %v477, 1
        %v606 = vsel %vm541, %v603, %v605
        %v607 = vrot.slane %v478, 1
        %v608 = vrot.slane %v479, 1
        %v609 = vsel %vm541, %v607, %v608
        %v610 = vrot.slane %v480, 1
        %v611 = vsel %vm541, %v608, %v610
        %v612 = vrot.slane %v481, 1
        %v613 = vrot.slane %v482, 1
        %v614 = vsel %vm541, %v612, %v613
        %v615 = vrot.slane %v483, 1
        %v616 = vsel %vm541, %v613, %v615
        %v617 = vrot.slane %v484, 1
        %v618 = vrot.slane %v485, 1
        %v619 = vsel %vm541, %v617, %v618
        %v620 = vrot.slane %v486, 1
        %v621 = vsel %vm541, %v618, %v620
        %vm654 = vcmask 1045504
        %v655 = vrot.slane %v439, 2
        %v656 = vrot.slane %v440, 2
        %v657 = vsel %vm654, %v655, %v656
        %v658 = vrot.slane %v441, 2
        %v659 = vsel %vm654, %v656, %v658
        %v660 = vrot.slane %v442, 2
        %v661 = vrot.slane %v443, 2
        %v662 = vsel %vm654, %v660, %v661
        %v663 = vrot.slane %v444, 2
        %v664 = vsel %vm654, %v661, %v663
        %v665 = vrot.slane %v445, 2
        %v666 = vrot.slane %v446, 2
        %v667 = vsel %vm654, %v665, %v666
        %v668 = vrot.slane %v447, 2
        %v669 = vsel %vm654, %v666, %v668
        %v670 = vrot.slane %v448, 2
        %v671 = vrot.slane %v449, 2
        %v672 = vsel %vm654, %v670, %v671
        %v673 = vrot.slane %v450, 2
        %v674 = vsel %vm654, %v671, %v673
        %v675 = vrot.slane %v451, 2
        %v676 = vrot.slane %v452, 2
        %v677 = vsel %vm654, %v675, %v676
        %v678 = vrot.slane %v453, 2
        %v679 = vsel %vm654, %v676, %v678
        %v680 = vrot.slane %v454, 2
        %v681 = vrot.slane %v455, 2
        %v682 = vsel %vm654, %v680, %v681
        %v683 = vrot.slane %v456, 2
        %v684 = vsel %vm654, %v681, %v683
        %v685 = vrot.slane %v457, 2
        %v686 = vrot.slane %v458, 2
        %v687 = vsel %vm654, %v685, %v686
        %v688 = vrot.slane %v459, 2
        %v689 = vsel %vm654, %v686, %v688
        %v690 = vrot.slane %v460, 2
        %v691 = vrot.slane %v461, 2
        %v692 = vsel %vm654, %v690, %v691
        %v693 = vrot.slane %v462, 2
        %v694 = vsel %vm654, %v691, %v693
        %v695 = vrot.slane %v463, 2
        %v696 = vrot.slane %v464, 2
        %v697 = vsel %vm654, %v695, %v696
        %v698 = vrot.slane %v465, 2
        %v699 = vsel %vm654, %v696, %v698
        %v700 = vrot.slane %v466, 2
        %v701 = vrot.slane %v467, 2
        %v702 = vsel %vm654, %v700, %v701
        %v703 = vrot.slane %v468, 2
        %v704 = vsel %vm654, %v701, %v703
        %v705 = vrot.slane %v469, 2
        %v706 = vrot.slane %v470, 2
        %v707 = vsel %vm654, %v705, %v706
        %v708 = vrot.slane %v471, 2
        %v709 = vsel %vm654, %v706, %v708
        %v710 = vrot.slane %v472, 2
        %v711 = vrot.slane %v473, 2
        %v712 = vsel %vm654, %v710, %v711
        %v713 = vrot.slane %v474, 2
        %v714 = vsel %vm654, %v711, %v713
        %v715 = vrot.slane %v475, 2
        %v716 = vrot.slane %v476, 2
        %v717 = vsel %vm654, %v715, %v716
        %v718 = vrot.slane %v477, 2
        %v719 = vsel %vm654, %v716, %v718
        %v720 = vrot.slane %v478, 2
        %v721 = vrot.slane %v479, 2
        %v722 = vsel %vm654, %v720, %v721
        %v723 = vrot.slane %v480, 2
        %v724 = vsel %vm654, %v721, %v723
        %v725 = vrot.slane %v481, 2
        %v726 = vrot.slane %v482, 2
        %v727 = vsel %vm654, %v725, %v726
        %v728 = vrot.slane %v483, 2
        %v729 = vsel %vm654, %v726, %v728
        %v730 = vrot.slane %v484, 2
        %v731 = vrot.slane %v485, 2
        %v732 = vsel %vm654, %v730, %v731
        %v733 = vrot.slane %v486, 2
        %v734 = vsel %vm654, %v731, %v733
        %v770 = vrot.slane %v487, 1
        %v771 = vrot.slane %v488, 1
        %v772 = vsel %vm541, %v770, %v771
        %v773 = vrot.slane %v489, 1
        %v774 = vsel %vm541, %v771, %v773
        %v777 = vrot.slane %v487, 2
        %v778 = vrot.slane %v488, 2
        %v779 = vsel %vm654, %v777, %v778
        %v780 = vrot.slane %v489, 2
        %v781 = vsel %vm654, %v778, %v780
        %v787 = vrot.slane %v490, 1
        %v788 = vrot.slane %v491, 1
        %v789 = vsel %vm541, %v787, %v788
        %v790 = vrot.slane %v492, 1
        %v791 = vsel %vm541, %v788, %v790
        %v794 = vrot.slane %v490, 2
        %v795 = vrot.slane %v491, 2
        %v796 = vsel %vm654, %v794, %v795
        %v797 = vrot.slane %v492, 2
        %v798 = vsel %vm654, %v795, %v797
        %v801 = vld [vmem:[%s251] sm:$0xff]
        %v802 = vld [vmem:[%s251 + $0x8] sm:$0xff]
        %v803 = vld [vmem:[%s251 + $0x10] sm:$0xff]
        %v804 = vld [vmem:[%s251 + $0x18] sm:$0xff]
        %v805 = vld [vmem:[%s251 + $0x20] sm:$0xff]
        %v806 = vld [vmem:[%s251 + $0x28] sm:$0xff]
        %v807 = vld [vmem:[%s251 + $0x30] sm:$0xff]
        %v808 = vld [vmem:[%s251 + $0x38] sm:$0xff]
        %v809 = vld [vmem:[%s251 + $0x40] sm:$0xff]
        %v810 = vld [vmem:[%s251 + $0x48] sm:$0xff]
        %v811 = vld [vmem:[%s251 + $0x50] sm:$0xff]
        %v812 = vld [vmem:[%s251 + $0x58] sm:$0xff]
        %v813 = vld [vmem:[%s251 + $0x60] sm:$0xff]
        %v814 = vld [vmem:[%s251 + $0x68] sm:$0xff]
        %v815 = vld [vmem:[%s251 + $0x70] sm:$0xff]
        %v816 = vld [vmem:[%s251 + $0x78] sm:$0xff]
        %v817 = vld [vmem:[%s251 + $0x80] sm:$0xff]
        %v818 = vld [vmem:[%s251 + $0x88] sm:$0xff]
        %v819 = vld [vmem:[%s251 + $0x90] sm:$0xff]
        %v820 = vld [vmem:[%s251 + $0x98] sm:$0xff]
        %v821 = vld [vmem:[%s251 + $0xa0] sm:$0xff]
        %v822 = vld [vmem:[%s251 + $0xa8] sm:$0xff]
        %v823 = vld [vmem:[%s251 + $0xb0] sm:$0xff]
        %v824 = vld [vmem:[%s251 + $0xb8] sm:$0xff]
        %v825 = vld [vmem:[%s251 + $0xc0] sm:$0xff]
        %v826 = vld [vmem:[%s251 + $0xc8] sm:$0xff]
        %v827 = vld [vmem:[%s251 + $0xd0] sm:$0xff]
        %v828 = vld [vmem:[%s251 + $0xd8] sm:$0xff]
        %v829 = vld [vmem:[%s251 + $0xe0] sm:$0xff]
        %v830 = vld [vmem:[%s251 + $0xe8] sm:$0xff]
        %v831 = vld [vmem:[%s251 + $0xf0] sm:$0xff]
        %v832 = vld [vmem:[%s251 + $0xf8] sm:$0xff]
        %v833 = vld [vmem:[%s251 + $0x100] sm:$0xff]
        %v834 = vld [vmem:[%s251 + $0x108] sm:$0xff]
        %v835 = vld [vmem:[%s251 + $0x110] sm:$0xff]
        %v836 = vld [vmem:[%s251 + $0x118] sm:$0xff]
        %v837 = vld [vmem:[%s251 + $0x120] sm:$0xff]
        %v838 = vld [vmem:[%s251 + $0x128] sm:$0xff]
        %v839 = vld [vmem:[%s251 + $0x130] sm:$0xff]
        %v840 = vld [vmem:[%s251 + $0x138] sm:$0xff]
        %v841 = vld [vmem:[%s251 + $0x140] sm:$0xff]
        %v842 = vld [vmem:[%s251 + $0x148] sm:$0xff]
        %v843 = vld [vmem:[%s251 + $0x150] sm:$0xff]
        %v844 = vld [vmem:[%s251 + $0x158] sm:$0xff]
        %v845 = vld [vmem:[%s251 + $0x160] sm:$0xff]
        %v846 = vld [vmem:[%s251 + $0x168] sm:$0xff]
        %v847 = vld [vmem:[%s251 + $0x170] sm:$0xff]
        %v848 = vld [vmem:[%s251 + $0x178] sm:$0xff]
        %v849 = vld [vmem:[%s251 + $0x180] sm:$0xff]
        %v850 = vld [vmem:[%s251 + $0x188] sm:$0xff]
        %v851 = vld [vmem:[%s251 + $0x190] sm:$0xff]
        %v852 = vld [vmem:[%s251 + $0x198] sm:$0xff]
        %v853 = vld [vmem:[%s251 + $0x1a0] sm:$0xff]
        %v854 = vld [vmem:[%s251 + $0x1a8] sm:$0xff]
        %v855 = vld [vmem:[%s251 + $0x1b0] sm:$0xff]
        %v856 = vld [vmem:[%s251 + $0x1b8] sm:$0xff]
        %v857 = vld [vmem:[%s251 + $0x1c0] sm:$0xff]
        %v858 = vld [vmem:[%s251 + $0x1c8] sm:$0xff]
        %v859 = vld [vmem:[%s251 + $0x1d0] sm:$0xff]
        %v860 = vld [vmem:[%s251 + $0x1d8] sm:$0xff]
        %v861 = vld [vmem:[%s251 + $0x1e0] sm:$0xff]
        %v862 = vld [vmem:[%s251 + $0x1e8] sm:$0xff]
        %v863 = vld [vmem:[%s251 + $0x1f0] sm:$0xff]
        %v864 = vld [vmem:[%s251 + $0x1f8] sm:$0xff]
        %v865 = vld [vmem:[%s251 + $0x200] sm:$0xff]
        %v866 = vld [vmem:[%s251 + $0x208] sm:$0xff]
        %v867 = vld [vmem:[%s251 + $0x210] sm:$0xff]
        %v868 = vld [vmem:[%s251 + $0x218] sm:$0xff]
        %v869 = vld [vmem:[%s251 + $0x220] sm:$0xff]
        %v870 = vld [vmem:[%s251 + $0x228] sm:$0xff]
        %v871 = vld [vmem:[%s251 + $0x230] sm:$0xff]
        %v872 = vld [vmem:[%s251 + $0x238] sm:$0xff]
        %v873 = vld [vmem:[%s251 + $0x240] sm:$0xff]
        %v874 = vld [vmem:[%s251 + $0x248] sm:$0xff]
        %v875 = vld [vmem:[%s251 + $0x250] sm:$0xff]
        %v876 = vld [vmem:[%s251 + $0x258] sm:$0xff]
        %v877 = vld [vmem:[%s251 + $0x260] sm:$0xff]
        %v878 = vld [vmem:[%s251 + $0x268] sm:$0xff]
        %v879 = vld [vmem:[%s251 + $0x270] sm:$0xff]
        %v880 = vld [vmem:[%s251 + $0x278] sm:$0xff]
        %v881 = vld [vmem:[%s251 + $0x280] sm:$0xff]
        %v882 = vld [vmem:[%s251 + $0x288] sm:$0xff]
        %v883 = vld [vmem:[%s251 + $0x290] sm:$0xff]
        %v884 = vld [vmem:[%s251 + $0x298] sm:$0xff]
        %v885 = vld [vmem:[%s251 + $0x2a0] sm:$0xff]
        %v886 = vld [vmem:[%s251 + $0x2a8] sm:$0xff]
        %v887 = vld [vmem:[%s251 + $0x2b0] sm:$0xff]
        %v888 = vld [vmem:[%s251 + $0x2b8] sm:$0xff]
        %v889 = vld [vmem:[%s251 + $0x2c0] sm:$0xff]
        %v890 = vld [vmem:[%s251 + $0x2c8] sm:$0xff]
        %v891 = vld [vmem:[%s251 + $0x2d0] sm:$0xff]
        %v892 = vld [vmem:[%s251 + $0x2d8] sm:$0xff]
        %v893 = vld [vmem:[%s251 + $0x2e0] sm:$0xff]
        %v894 = vld [vmem:[%s251 + $0x2e8] sm:$0xff]
        %v895 = vld [vmem:[%s251 + $0x2f0] sm:$0xff]
        %v896 = vld [vmem:[%s251 + $0x2f8] sm:$0xff]
        %v897 = vld [vmem:[%s251 + $0x300] sm:$0xff]
        %v898 = vld [vmem:[%s251 + $0x308] sm:$0xff]
        %v899 = vld [vmem:[%s251 + $0x310] sm:$0xff]
        %v900 = vld [vmem:[%s251 + $0x318] sm:$0xff]
        %v901 = vld [vmem:[%s251 + $0x320] sm:$0xff]
        %v902 = vld [vmem:[%s251 + $0x328] sm:$0xff]
        %v903 = vld [vmem:[%s251 + $0x330] sm:$0xff]
        %v904 = vld [vmem:[%s251 + $0x338] sm:$0xff]
        %v905 = vld [vmem:[%s251 + $0x340] sm:$0xff]
        %v906 = vld [vmem:[%s251 + $0x348] sm:$0xff]
        %v907 = vld [vmem:[%s251 + $0x350] sm:$0xff]
        %v908 = vld [vmem:[%s251 + $0x358] sm:$0xff]
        %v909 = vld [vmem:[%s251 + $0x360] sm:$0xff]
        %v910 = vld [vmem:[%s251 + $0x368] sm:$0xff]
        %v911 = vld [vmem:[%s251 + $0x370] sm:$0xff]
        %v912 = vld [vmem:[%s251 + $0x378] sm:$0xff]
        %v913 = vld [vmem:[%s251 + $0x380] sm:$0xff]
        %v914 = vld [vmem:[%s251 + $0x388] sm:$0xff]
        %v915 = vld [vmem:[%s251 + $0x390] sm:$0xff]
        %v916 = vld [vmem:[%s251 + $0x398] sm:$0xff]
        %v917 = vld [vmem:[%s251 + $0x3a0] sm:$0xff]
        %v918 = vld [vmem:[%s251 + $0x3a8] sm:$0xff]
        %v919 = vld [vmem:[%s251 + $0x3b0] sm:$0xff]
        %v920 = vld [vmem:[%s251 + $0x3b8] sm:$0xff]
        %v921 = vld [vmem:[%s251 + $0x3c0] sm:$0xff]
        %v922 = vld [vmem:[%s251 + $0x3c8] sm:$0xff]
        %v923 = vld [vmem:[%s251 + $0x3d0] sm:$0xff]
        %v924 = vld [vmem:[%s251 + $0x3d8] sm:$0xff]
        %v925 = vld [vmem:[%s251 + $0x3e0] sm:$0xff]
        %v926 = vld [vmem:[%s251 + $0x3e8] sm:$0xff]
        %v927 = vld [vmem:[%s251 + $0x3f0] sm:$0xff]
        %v928 = vld [vmem:[%s251 + $0x3f8] sm:$0xff]
        %v929 = vld [vmem:[%s251 + $0x400] sm:$0xff]
        %v930 = vld [vmem:[%s251 + $0x408] sm:$0xff]
        %v931 = vld [vmem:[%s251 + $0x410] sm:$0xff]
        %v932 = vld [vmem:[%s251 + $0x418] sm:$0xff]
        %v933 = vld [vmem:[%s251 + $0x420] sm:$0xff]
        %v934 = vld [vmem:[%s251 + $0x428] sm:$0xff]
        %v935 = vld [vmem:[%s251 + $0x430] sm:$0xff]
        %v936 = vld [vmem:[%s251 + $0x438] sm:$0xff]
        %v937 = vld [vmem:[%s251 + $0x440] sm:$0xff]
        %v938 = vld [vmem:[%s251 + $0x448] sm:$0xff]
        %v939 = vld [vmem:[%s251 + $0x450] sm:$0xff]
        %v940 = vld [vmem:[%s251 + $0x458] sm:$0xff]
        %v941 = vld [vmem:[%s251 + $0x460] sm:$0xff]
        %v942 = vld [vmem:[%s251 + $0x468] sm:$0xff]
        %v943 = vld [vmem:[%s251 + $0x470] sm:$0xff]
        %v944 = vld [vmem:[%s251 + $0x478] sm:$0xff]
        %945 = vmatprep.subr.mxu0 0.0
        %946 = vmatpush1.msra.mxu0 %v801
        %947 = vmatprep.subr.mxu0 0.0
        %948 = vmatpush1.msra.mxu0 %v802
        %949 = vmatprep.subr.mxu0 0.0
        %950 = vmatpush1.msra.mxu0 %v803
        %951 = vmatprep.subr.mxu0 0.0
        %952 = vmatpush1.msra.mxu0 %v804
        %953 = vmatprep.subr.mxu0 0.0
        %954 = vmatpush1.msra.mxu0 %v805
        %955 = vmatprep.subr.mxu0 0.0
        %956 = vmatpush1.msra.mxu0 %v806
        %957 = vmatprep.subr.mxu0 0.0
        %958 = vmatpush1.msra.mxu0 %v807
        %959 = vmatprep.subr.mxu0 0.0
        %960 = vmatpush1.msra.mxu0 %v808
        %961 = vmatprep.subr.mxu0 0.0
        %962 = vmatpush1.msra.mxu0 %v809
        %963 = vmatprep.subr.mxu0 0.0
        %964 = vmatpush1.msra.mxu0 %v810
        %965 = vmatprep.subr.mxu0 0.0
        %966 = vmatpush1.msra.mxu0 %v811
        %967 = vmatprep.subr.mxu0 0.0
        %968 = vmatpush1.msra.mxu0 %v812
        %969 = vmatprep.subr.mxu0 0.0
        %970 = vmatpush1.msra.mxu0 %v813
        %971 = vmatprep.subr.mxu0 0.0
        %972 = vmatpush1.msra.mxu0 %v814
        %973 = vmatprep.subr.mxu0 0.0
        %974 = vmatpush1.msra.mxu0 %v815
        %975 = vmatprep.subr.mxu0 0.0
        %976 = vmatpush1.msra.mxu0 %v816
        %977 = vmatprep.subr.mxu0 0.0
        %978 = vmatpush1.msra.mxu0 %v817
        %979 = vmatprep.subr.mxu0 0.0
        %980 = vmatpush1.msra.mxu0 %v818
        %981 = vmatprep.subr.mxu0 0.0
        %982 = vmatpush1.msra.mxu0 %v819
        %983 = vmatprep.subr.mxu0 0.0
        %984 = vmatpush1.msra.mxu0 %v820
        %985 = vmatprep.subr.mxu0 0.0
        %986 = vmatpush1.msra.mxu0 %v821
        %987 = vmatprep.subr.mxu0 0.0
        %988 = vmatpush1.msra.mxu0 %v822
        %989 = vmatprep.subr.mxu0 0.0
        %990 = vmatpush1.msra.mxu0 %v823
        %991 = vmatprep.subr.mxu0 0.0
        %992 = vmatpush1.msra.mxu0 %v824
        %993 = vmatprep.subr.mxu0 0.0
        %994 = vmatpush1.msra.mxu0 %v825
        %995 = vmatprep.subr.mxu0 0.0
        %996 = vmatpush1.msra.mxu0 %v826
        %997 = vmatprep.subr.mxu0 0.0
        %998 = vmatpush1.msra.mxu0 %v827
        %999 = vmatprep.subr.mxu0 0.0
        %1000 = vmatpush1.msra.mxu0 %v828
        %1001 = vmatprep.subr.mxu0 0.0
        %1002 = vmatpush1.msra.mxu0 %v829
        %1003 = vmatprep.subr.mxu0 0.0
        %1004 = vmatpush1.msra.mxu0 %v830
        %1005 = vmatprep.subr.mxu0 0.0
        %1006 = vmatpush1.msra.mxu0 %v831
        %1007 = vmatprep.subr.mxu0 0.0
        %1008 = vmatpush1.msra.mxu0 %v832
        %1009 = vmatprep.mubr.f32.mxu0 %v544
        %1010 = vmatmul.mubr.f32.gmra.mrb[0].mxu0 %v439
        %v1011 = vpop.f32.mrb[0].mxu0
        %v1012 = vadd.f32 0.0, %v1011
        %v1013 = vpop.f32.mrb[0].mxu0
        %1014 = vmatprep.mubr.f32.mxu0 %v546
        %1015 = vmatmul.mubr.f32.gmra.mrb[0].mxu0 %v440
        %v1016 = vpop.f32.mrb[0].mxu0
        %v1017 = vadd.f32 0.0, %v1016
        %v1018 = vpop.f32.mrb[0].mxu0
        %1019 = vmatprep.mubr.f32.mxu0 %v549
        %1020 = vmatmul.mubr.f32.gmra.mrb[0].mxu0 %v442
        %v1021 = vpop.f32.mrb[0].mxu0
        %v1022 = vadd.f32 0.0, %v1021
        %v1023 = vpop.f32.mrb[0].mxu0
        %1024 = vmatprep.mubr.f32.mxu0 %v551
        %1025 = vmatmul.mubr.f32.gmra.mrb[0].mxu0 %v443
        %v1026 = vpop.f32.mrb[0].mxu0
        %v1027 = vadd.f32 0.0, %v1026
        %v1028 = vpop.f32.mrb[0].mxu0
        %1029 = vmatprep.mubr.f32.mxu0 %v554
        %1030 = vmatmul.mubr.f32.gmra.mrb[0].mxu0 %v445
        %v1031 = vpop.f32.mrb[0].mxu0
        %v1032 = vadd.f32 0.0, %v1031
        %v1033 = vpop.f32.mrb[0].mxu0
        %1034 = vmatprep.mubr.f32.mxu0 %v556
        %1035 = vmatmul.mubr.f32.gmra.mrb[0].mxu0 %v446
        %v1036 = vpop.f32.mrb[0].mxu0
        %v1037 = vadd.f32 0.0, %v1036
        %v1038 = vpop.f32.mrb[0].mxu0
        %1039 = vmatprep.mubr.f32.mxu0 %v559
        %1040 = vmatmul.mubr.f32.gmra.mrb[0].mxu0 %v448
        %v1041 = vpop.f32.mrb[0].mxu0
        %v1042 = vadd.f32 0.0, %v1041
        %v1043 = vpop.f32.mrb[0].mxu0
        %1044 = vmatprep.mubr.f32.mxu0 %v561
        %1045 = vmatmul.mubr.f32.gmra.mrb[0].mxu0 %v449
        %v1046 = vpop.f32.mrb[0].mxu0
        %v1047 = vadd.f32 0.0, %v1046
        %v1048 = vpop.f32.mrb[0].mxu0
        %1049 = vmatprep.mubr.f32.mxu0 %v564
        %1050 = vmatmul.mubr.f32.gmra.mrb[0].mxu0 %v451
        %v1051 = vpop.f32.mrb[0].mxu0
        %v1052 = vadd.f32 0.0, %v1051
        %v1053 = vpop.f32.mrb[0].mxu0
        %1054 = vmatprep.mubr.f32.mxu0 %v566
        %1055 = vmatmul.mubr.f32.gmra.mrb[0].mxu0 %v452
        %v1056 = vpop.f32.mrb[0].mxu0
        %v1057 = vadd.f32 0.0, %v1056
        %v1058 = vpop.f32.mrb[0].mxu0
        %1059 = vmatprep.mubr.f32.mxu0 %v569
        %1060 = vmatmul.mubr.f32.gmra.mrb[0].mxu0 %v454
        %v1061 = vpop.f32.mrb[0].mxu0
        %v1062 = vadd.f32 0.0, %v1061
        %v1063 = vpop.f32.mrb[0].mxu0
        %1064 = vmatprep.mubr.f32.mxu0 %v571
        %1065 = vmatmul.mubr.f32.gmra.mrb[0].mxu0 %v455
        %v1066 = vpop.f32.mrb[0].mxu0
        %v1067 = vadd.f32 0.0, %v1066
        %v1068 = vpop.f32.mrb[0].mxu0
        %1069 = vmatprep.mubr.f32.mxu0 %v574
        %1070 = vmatmul.mubr.f32.gmra.mrb[0].mxu0 %v457
        %v1071 = vpop.f32.mrb[0].mxu0
        %v1072 = vadd.f32 0.0, %v1071
        %v1073 = vpop.f32.mrb[0].mxu0
        %1074 = vmatprep.mubr.f32.mxu0 %v576
        %1075 = vmatmul.mubr.f32.gmra.mrb[0].mxu0 %v458
        %v1076 = vpop.f32.mrb[0].mxu0
        %v1077 = vadd.f32 0.0, %v1076
        %v1078 = vpop.f32.mrb[0].mxu0
        %1079 = vmatprep.mubr.f32.mxu0 %v579
        %1080 = vmatmul.mubr.f32.gmra.mrb[0].mxu0 %v460
        %v1081 = vpop.f32.mrb[0].mxu0
        %v1082 = vadd.f32 0.0, %v1081
        %v1083 = vpop.f32.mrb[0].mxu0
        %1084 = vmatprep.mubr.f32.mxu0 %v581
        %1085 = vmatmul.mubr.f32.gmra.mrb[0].mxu0 %v461
        %v1086 = vpop.f32.mrb[0].mxu0
        %v1087 = vadd.f32 0.0, %v1086
        %v1088 = vpop.f32.mrb[0].mxu0
        %1089 = vmatprep.mubr.f32.mxu0 %v584
        %1090 = vmatmul.mubr.f32.gmra.mrb[0].mxu0 %v463
        %v1091 = vpop.f32.mrb[0].mxu0
        %v1092 = vadd.f32 0.0, %v1091
        %v1093 = vpop.f32.mrb[0].mxu0
        %1094 = vmatprep.mubr.f32.mxu0 %v586
        %1095 = vmatmul.mubr.f32.gmra.mrb[0].mxu0 %v464
        %v1096 = vpop.f32.mrb[0].mxu0
        %v1097 = vadd.f32 0.0, %v1096
        %v1098 = vpop.f32.mrb[0].mxu0
        %1099 = vmatprep.mubr.f32.mxu0 %v589
        %1100 = vmatmul.mubr.f32.gmra.mrb[0].mxu0 %v466
        %v1101 = vpop.f32.mrb[0].mxu0
        %v1102 = vadd.f32 0.0, %v1101
        %v1103 = vpop.f32.mrb[0].mxu0
        %1104 = vmatprep.mubr.f32.mxu0 %v591
        %1105 = vmatmul.mubr.f32.gmra.mrb[0].mxu0 %v467
        %v1106 = vpop.f32.mrb[0].mxu0
        %v1107 = vadd.f32 0.0, %v1106
        %v1108 = vpop.f32.mrb[0].mxu0
        %1109 = vmatprep.mubr.f32.mxu0 %v594
        %1110 = vmatmul.mubr.f32.gmra.mrb[0].mxu0 %v469
        %v1111 = vpop.f32.mrb[0].mxu0
        %v1112 = vadd.f32 0.0, %v1111
        %v1113 = vpop.f32.mrb[0].mxu0
        %1114 = vmatprep.mubr.f32.mxu0 %v596
        %1115 = vmatmul.mubr.f32.gmra.mrb[0].mxu0 %v470
        %v1116 = vpop.f32.mrb[0].mxu0
        %v1117 = vadd.f32 0.0, %v1116
        %v1118 = vpop.f32.mrb[0].mxu0
        %1119 = vmatprep.mubr.f32.mxu0 %v599
        %1120 = vmatmul.mubr.f32.gmra.mrb[0].mxu0 %v472
        %v1121 = vpop.f32.mrb[0].mxu0
        %v1122 = vadd.f32 0.0, %v1121
        %v1123 = vpop.f32.mrb[0].mxu0
        %1124 = vmatprep.mubr.f32.mxu0 %v601
        %1125 = vmatmul.mubr.f32.gmra.mrb[0].mxu0 %v473
        %v1126 = vpop.f32.mrb[0].mxu0
        %v1127 = vadd.f32 0.0, %v1126
        %v1128 = vpop.f32.mrb[0].mxu0
        %1129 = vmatprep.mubr.f32.mxu0 %v604
        %1130 = vmatmul.mubr.f32.gmra.mrb[0].mxu0 %v475
        %v1131 = vpop.f32.mrb[0].mxu0
        %v1132 = vadd.f32 0.0, %v1131
        %v1133 = vpop.f32.mrb[0].mxu0
        %1134 = vmatprep.mubr.f32.mxu0 %v606
        %1135 = vmatmul.mubr.f32.gmra.mrb[0].mxu0 %v476
        %v1136 = vpop.f32.mrb[0].mxu0
        %v1137 = vadd.f32 0.0, %v1136
        %v1138 = vpop.f32.mrb[0].mxu0
        %1139 = vmatprep.mubr.f32.mxu0 %v609
        %1140 = vmatmul.mubr.f32.gmra.mrb[0].mxu0 %v478
        %v1141 = vpop.f32.mrb[0].mxu0
        %v1142 = vadd.f32 0.0, %v1141
        %v1143 = vpop.f32.mrb[0].mxu0
        %1144 = vmatprep.mubr.f32.mxu0 %v611
        %1145 = vmatmul.mubr.f32.gmra.mrb[0].mxu0 %v479
        %v1146 = vpop.f32.mrb[0].mxu0
        %v1147 = vadd.f32 0.0, %v1146
        %v1148 = vpop.f32.mrb[0].mxu0
        %1149 = vmatprep.mubr.f32.mxu0 %v614
        %1150 = vmatmul.mubr.f32.gmra.mrb[0].mxu0 %v481
        %v1151 = vpop.f32.mrb[0].mxu0
        %v1152 = vadd.f32 0.0, %v1151
        %v1153 = vpop.f32.mrb[0].mxu0
        %1154 = vmatprep.mubr.f32.mxu0 %v616
        %1155 = vmatmul.mubr.f32.gmra.mrb[0].mxu0 %v482
        %v1156 = vpop.f32.mrb[0].mxu0
        %v1157 = vadd.f32 0.0, %v1156
        %v1158 = vpop.f32.mrb[0].mxu0
        %1159 = vmatprep.mubr.f32.mxu0 %v619
        %1160 = vmatmul.mubr.f32.gmra.mrb[0].mxu0 %v484
        %v1161 = vpop.f32.mrb[0].mxu0
        %v1162 = vadd.f32 0.0, %v1161
        %v1163 = vpop.f32.mrb[0].mxu0
        %1164 = vmatprep.mubr.f32.mxu0 %v621
        %1165 = vmatmul.mubr.f32.gmra.mrb[0].mxu0 %v485
        %v1166 = vpop.f32.mrb[0].mxu0
        %v1167 = vadd.f32 0.0, %v1166
        %v1168 = vpop.f32.mrb[0].mxu0
        %1169 = vdwg.mxu0
        %1170 = vmatprep.subr.mxu0 0.0
        %1171 = vmatpush1.msra.mxu0 %v833
        %1172 = vmatprep.subr.mxu0 0.0
        %1173 = vmatpush1.msra.mxu0 %v834
        %1174 = vmatprep.subr.mxu0 0.0
        %1175 = vmatpush1.msra.mxu0 %v835
        %1176 = vmatprep.subr.mxu0 0.0
        %1177 = vmatpush1.msra.mxu0 %v836
        %1178 = vmatprep.subr.mxu0 0.0
        %1179 = vmatpush1.msra.mxu0 %v837
        %1180 = vmatprep.subr.mxu0 0.0
        %1181 = vmatpush1.msra.mxu0 %v838
        %1182 = vmatprep.subr.mxu0 0.0
        %1183 = vmatpush1.msra.mxu0 %v839
        %1184 = vmatprep.subr.mxu0 0.0
        %1185 = vmatpush1.msra.mxu0 %v840
        %1186 = vmatprep.subr.mxu0 0.0
        %1187 = vmatpush1.msra.mxu0 %v841
        %1188 = vmatprep.subr.mxu0 0.0
        %1189 = vmatpush1.msra.mxu0 %v842
        %1190 = vmatprep.subr.mxu0 0.0
        %1191 = vmatpush1.msra.mxu0 %v843
        %1192 = vmatprep.subr.mxu0 0.0
        %1193 = vmatpush1.msra.mxu0 %v844
        %1194 = vmatprep.subr.mxu0 0.0
        %1195 = vmatpush1.msra.mxu0 %v845
        %1196 = vmatprep.subr.mxu0 0.0
        %1197 = vmatpush1.msra.mxu0 %v846
        %1198 = vmatprep.subr.mxu0 0.0
        %1199 = vmatpush1.msra.mxu0 %v847
        %1200 = vmatprep.subr.mxu0 0.0
        %1201 = vmatpush1.msra.mxu0 %v848
        %1202 = vmatprep.subr.mxu0 0.0
        %1203 = vmatpush1.msra.mxu0 %v849
        %1204 = vmatprep.subr.mxu0 0.0
        %1205 = vmatpush1.msra.mxu0 %v850
        %1206 = vmatprep.subr.mxu0 0.0
        %1207 = vmatpush1.msra.mxu0 %v851
        %1208 = vmatprep.subr.mxu0 0.0
        %1209 = vmatpush1.msra.mxu0 %v852
        %1210 = vmatprep.subr.mxu0 0.0
        %1211 = vmatpush1.msra.mxu0 %v853
        %1212 = vmatprep.subr.mxu0 0.0
        %1213 = vmatpush1.msra.mxu0 %v854
        %1214 = vmatprep.subr.mxu0 0.0
        %1215 = vmatpush1.msra.mxu0 %v855
        %1216 = vmatprep.subr.mxu0 0.0
        %1217 = vmatpush1.msra.mxu0 %v856
        %1218 = vmatprep.subr.mxu0 0.0
        %1219 = vmatpush1.msra.mxu0 %v857
        %1220 = vmatprep.subr.mxu0 0.0
        %1221 = vmatpush1.msra.mxu0 %v858
        %1222 = vmatprep.subr.mxu0 0.0
        %1223 = vmatpush1.msra.mxu0 %v859
        %1224 = vmatprep.subr.mxu0 0.0
        %1225 = vmatpush1.msra.mxu0 %v860
        %1226 = vmatprep.subr.mxu0 0.0
        %1227 = vmatpush1.msra.mxu0 %v861
        %1228 = vmatprep.subr.mxu0 0.0
        %1229 = vmatpush1.msra.mxu0 %v862
        %1230 = vmatprep.subr.mxu0 0.0
        %1231 = vmatpush1.msra.mxu0 %v863
        %1232 = vmatprep.subr.mxu0 0.0
        %1233 = vmatpush1.msra.mxu0 %v864
        %1234 = vmatprep.mubr.f32.mxu0 %v442
        %1235 = vmatmul.mubr.f32.gmra.mrb[0].mxu0 %v657
        %v1236 = vpop.f32.mrb[0].mxu0
        %v1237 = vadd.f32 %v1012, %v1236
        %v1238 = vpop.f32.mrb[0].mxu0
        %1239 = vmatprep.mubr.f32.mxu0 %v443
        %1240 = vmatmul.mubr.f32.gmra.mrb[0].mxu0 %v659
        %v1241 = vpop.f32.mrb[0].mxu0
        %v1242 = vadd.f32 %v1017, %v1241
        %v1243 = vpop.f32.mrb[0].mxu0
        %1244 = vmatprep.mubr.f32.mxu0 %v445
        %1245 = vmatmul.mubr.f32.gmra.mrb[0].mxu0 %v662
        %v1246 = vpop.f32.mrb[0].mxu0
        %v1247 = vadd.f32 %v1022, %v1246
        %v1248 = vpop.f32.mrb[0].mxu0
        %1249 = vmatprep.mubr.f32.mxu0 %v446
        %1250 = vmatmul.mubr.f32.gmra.mrb[0].mxu0 %v664
        %v1251 = vpop.f32.mrb[0].mxu0
        %v1252 = vadd.f32 %v1027, %v1251
        %v1253 = vpop.f32.mrb[0].mxu0
        %1254 = vmatprep.mubr.f32.mxu0 %v448
        %1255 = vmatmul.mubr.f32.gmra.mrb[0].mxu0 %v667
        %v1256 = vpop.f32.mrb[0].mxu0
        %v1257 = vadd.f32 %v1032, %v1256
        %v1258 = vpop.f32.mrb[0].mxu0
        %1259 = vmatprep.mubr.f32.mxu0 %v449
        %1260 = vmatmul.mubr.f32.gmra.mrb[0].mxu0 %v669
        %v1261 = vpop.f32.mrb[0].mxu0
        %v1262 = vadd.f32 %v1037, %v1261
        %v1263 = vpop.f32.mrb[0].mxu0
        %1264 = vmatprep.mubr.f32.mxu0 %v451
        %1265 = vmatmul.mubr.f32.gmra.mrb[0].mxu0 %v672
        %v1266 = vpop.f32.mrb[0].mxu0
        %v1267 = vadd.f32 %v1042, %v1266
        %v1268 = vpop.f32.mrb[0].mxu0
        %1269 = vmatprep.mubr.f32.mxu0 %v452
        %1270 = vmatmul.mubr.f32.gmra.mrb[0].mxu0 %v674
        %v1271 = vpop.f32.mrb[0].mxu0
        %v1272 = vadd.f32 %v1047, %v1271
        %v1273 = vpop.f32.mrb[0].mxu0
        %1274 = vmatprep.mubr.f32.mxu0 %v454
        %1275 = vmatmul.mubr.f32.gmra.mrb[0].mxu0 %v677
        %v1276 = vpop.f32.mrb[0].mxu0
        %v1277 = vadd.f32 %v1052, %v1276
        %v1278 = vpop.f32.mrb[0].mxu0
        %1279 = vmatprep.mubr.f32.mxu0 %v455
        %1280 = vmatmul.mubr.f32.gmra.mrb[0].mxu0 %v679
        %v1281 = vpop.f32.mrb[0].mxu0
        %v1282 = vadd.f32 %v1057, %v1281
        %v1283 = vpop.f32.mrb[0].mxu0
        %1284 = vmatprep.mubr.f32.mxu0 %v457
        %1285 = vmatmul.mubr.f32.gmra.mrb[0].mxu0 %v682
        %v1286 = vpop.f32.mrb[0].mxu0
        %v1287 = vadd.f32 %v1062, %v1286
        %v1288 = vpop.f32.mrb[0].mxu0
        %1289 = vmatprep.mubr.f32.mxu0 %v458
        %1290 = vmatmul.mubr.f32.gmra.mrb[0].mxu0 %v684
        %v1291 = vpop.f32.mrb[0].mxu0
        %v1292 = vadd.f32 %v1067, %v1291
        %v1293 = vpop.f32.mrb[0].mxu0
        %1294 = vmatprep.mubr.f32.mxu0 %v460
        %1295 = vmatmul.mubr.f32.gmra.mrb[0].mxu0 %v687
        %v1296 = vpop.f32.mrb[0].mxu0
        %v1297 = vadd.f32 %v1072, %v1296
        %v1298 = vpop.f32.mrb[0].mxu0
        %1299 = vmatprep.mubr.f32.mxu0 %v461
        %1300 = vmatmul.mubr.f32.gmra.mrb[0].mxu0 %v689
        %v1301 = vpop.f32.mrb[0].mxu0
        %v1302 = vadd.f32 %v1077, %v1301
        %v1303 = vpop.f32.mrb[0].mxu0
        %1304 = vmatprep.mubr.f32.mxu0 %v463
        %1305 = vmatmul.mubr.f32.gmra.mrb[0].mxu0 %v692
        %v1306 = vpop.f32.mrb[0].mxu0
        %v1307 = vadd.f32 %v1082, %v1306
        %v1308 = vpop.f32.mrb[0].mxu0
        %1309 = vmatprep.mubr.f32.mxu0 %v464
        %1310 = vmatmul.mubr.f32.gmra.mrb[0].mxu0 %v694
        %v1311 = vpop.f32.mrb[0].mxu0
        %v1312 = vadd.f32 %v1087, %v1311
        %v1313 = vpop.f32.mrb[0].mxu0
        %1314 = vmatprep.mubr.f32.mxu0 %v466
        %1315 = vmatmul.mubr.f32.gmra.mrb[0].mxu0 %v697
        %v1316 = vpop.f32.mrb[0].mxu0
        %v1317 = vadd.f32 %v1092, %v1316
        %v1318 = vpop.f32.mrb[0].mxu0
        %1319 = vmatprep.mubr.f32.mxu0 %v467
        %1320 = vmatmul.mubr.f32.gmra.mrb[0].mxu0 %v699
        %v1321 = vpop.f32.mrb[0].mxu0
        %v1322 = vadd.f32 %v1097, %v1321
        %v1323 = vpop.f32.mrb[0].mxu0
        %1324 = vmatprep.mubr.f32.mxu0 %v469
        %1325 = vmatmul.mubr.f32.gmra.mrb[0].mxu0 %v702
        %v1326 = vpop.f32.mrb[0].mxu0
        %v1327 = vadd.f32 %v1102, %v1326
        %v1328 = vpop.f32.mrb[0].mxu0
        %1329 = vmatprep.mubr.f32.mxu0 %v470
        %1330 = vmatmul.mubr.f32.gmra.mrb[0].mxu0 %v704
        %v1331 = vpop.f32.mrb[0].mxu0
        %v1332 = vadd.f32 %v1107, %v1331
        %v1333 = vpop.f32.mrb[0].mxu0
        %1334 = vmatprep.mubr.f32.mxu0 %v472
        %1335 = vmatmul.mubr.f32.gmra.mrb[0].mxu0 %v707
        %v1336 = vpop.f32.mrb[0].mxu0
        %v1337 = vadd.f32 %v1112, %v1336
        %v1338 = vpop.f32.mrb[0].mxu0
        %1339 = vmatprep.mubr.f32.mxu0 %v473
        %1340 = vmatmul.mubr.f32.gmra.mrb[0].mxu0 %v709
        %v1341 = vpop.f32.mrb[0].mxu0
        %v1342 = vadd.f32 %v1117, %v1341
        %v1343 = vpop.f32.mrb[0].mxu0
        %1344 = vmatprep.mubr.f32.mxu0 %v475
        %1345 = vmatmul.mubr.f32.gmra.mrb[0].mxu0 %v712
        %v1346 = vpop.f32.mrb[0].mxu0
        %v1347 = vadd.f32 %v1122, %v1346
        %v1348 = vpop.f32.mrb[0].mxu0
        %1349 = vmatprep.mubr.f32.mxu0 %v476
        %1350 = vmatmul.mubr.f32.gmra.mrb[0].mxu0 %v714
        %v1351 = vpop.f32.mrb[0].mxu0
        %v1352 = vadd.f32 %v1127, %v1351
        %v1353 = vpop.f32.mrb[0].mxu0
        %1354 = vmatprep.mubr.f32.mxu0 %v478
        %1355 = vmatmul.mubr.f32.gmra.mrb[0].mxu0 %v717
        %v1356 = vpop.f32.mrb[0].mxu0
        %v1357 = vadd.f32 %v1132, %v1356
        %v1358 = vpop.f32.mrb[0].mxu0
        %1359 = vmatprep.mubr.f32.mxu0 %v479
        %1360 = vmatmul.mubr.f32.gmra.mrb[0].mxu0 %v719
        %v1361 = vpop.f32.mrb[0].mxu0
        %v1362 = vadd.f32 %v1137, %v1361
        %v1363 = vpop.f32.mrb[0].mxu0
        %1364 = vmatprep.mubr.f32.mxu0 %v481
        %1365 = vmatmul.mubr.f32.gmra.mrb[0].mxu0 %v722
        %v1366 = vpop.f32.mrb[0].mxu0
        %v1367 = vadd.f32 %v1142, %v1366
        %v1368 = vpop.f32.mrb[0].mxu0
        %1369 = vmatprep.mubr.f32.mxu0 %v482
        %1370 = vmatmul.mubr.f32.gmra.mrb[0].mxu0 %v724
        %v1371 = vpop.f32.mrb[0].mxu0
        %v1372 = vadd.f32 %v1147, %v1371
        %v1373 = vpop.f32.mrb[0].mxu0
        %1374 = vmatprep.mubr.f32.mxu0 %v484
        %1375 = vmatmul.mubr.f32.gmra.mrb[0].mxu0 %v727
        %v1376 = vpop.f32.mrb[0].mxu0
        %v1377 = vadd.f32 %v1152, %v1376
        %v1378 = vpop.f32.mrb[0].mxu0
        %1379 = vmatprep.mubr.f32.mxu0 %v485
        %1380 = vmatmul.mubr.f32.gmra.mrb[0].mxu0 %v729
        %v1381 = vpop.f32.mrb[0].mxu0
        %v1382 = vadd.f32 %v1157, %v1381
        %v1383 = vpop.f32.mrb[0].mxu0
        %1384 = vmatprep.mubr.f32.mxu0 %v487
        %1385 = vmatmul.mubr.f32.gmra.mrb[0].mxu0 %v732
        %v1386 = vpop.f32.mrb[0].mxu0
        %v1387 = vadd.f32 %v1162, %v1386
        %v1388 = vpop.f32.mrb[0].mxu0
        %1389 = vmatprep.mubr.f32.mxu0 %v488
        %1390 = vmatmul.mubr.f32.gmra.mrb[0].mxu0 %v734
        %v1391 = vpop.f32.mrb[0].mxu0
        %v1392 = vadd.f32 %v1167, %v1391
        %v1393 = vpop.f32.mrb[0].mxu0
        %1394 = vdwg.mxu0
        %1395 = vmatprep.subr.mxu0 0.0
        %1396 = vmatpush1.msra.mxu0 %v865
        %1397 = vmatprep.subr.mxu0 0.0
        %1398 = vmatpush1.msra.mxu0 %v866
        %1399 = vmatprep.subr.mxu0 0.0
        %1400 = vmatpush1.msra.mxu0 %v867
        %1401 = vmatprep.subr.mxu0 0.0
        %1402 = vmatpush1.msra.mxu0 %v868
        %1403 = vmatprep.subr.mxu0 0.0
        %1404 = vmatpush1.msra.mxu0 %v869
        %1405 = vmatprep.subr.mxu0 0.0
        %1406 = vmatpush1.msra.mxu0 %v870
        %1407 = vmatprep.subr.mxu0 0.0
        %1408 = vmatpush1.msra.mxu0 %v871
        %1409 = vmatprep.subr.mxu0 0.0
        %1410 = vmatpush1.msra.mxu0 %v872
        %1411 = vmatprep.subr.mxu0 0.0
        %1412 = vmatpush1.msra.mxu0 %v873
        %1413 = vmatprep.subr.mxu0 0.0
        %1414 = vmatpush1.msra.mxu0 %v874
        %1415 = vmatprep.subr.mxu0 0.0
        %1416 = vmatpush1.msra.mxu0 %v875
        %1417 = vmatprep.subr.mxu0 0.0
        %1418 = vmatpush1.msra.mxu0 %v876
        %1419 = vmatprep.subr.mxu0 0.0
        %1420 = vmatpush1.msra.mxu0 %v877
        %1421 = vmatprep.subr.mxu0 0.0
        %1422 = vmatpush1.msra.mxu0 %v878
        %1423 = vmatprep.subr.mxu0 0.0
        %1424 = vmatpush1.msra.mxu0 %v879
        %1425 = vmatprep.subr.mxu0 0.0
        %1426 = vmatpush1.msra.mxu0 %v880
        %1427 = vmatprep.subr.mxu0 0.0
        %1428 = vmatpush1.msra.mxu0 %v881
        %1429 = vmatprep.subr.mxu0 0.0
        %1430 = vmatpush1.msra.mxu0 %v882
        %1431 = vmatprep.subr.mxu0 0.0
        %1432 = vmatpush1.msra.mxu0 %v883
        %1433 = vmatprep.subr.mxu0 0.0
        %1434 = vmatpush1.msra.mxu0 %v884
        %1435 = vmatprep.subr.mxu0 0.0
        %1436 = vmatpush1.msra.mxu0 %v885
        %1437 = vmatprep.subr.mxu0 0.0
        %1438 = vmatpush1.msra.mxu0 %v886
        %1439 = vmatprep.subr.mxu0 0.0
        %1440 = vmatpush1.msra.mxu0 %v887
        %1441 = vmatprep.subr.mxu0 0.0
        %1442 = vmatpush1.msra.mxu0 %v888
        %1443 = vmatprep.subr.mxu0 0.0
        %1444 = vmatpush1.msra.mxu0 %v889
        %1445 = vmatprep.subr.mxu0 0.0
        %1446 = vmatpush1.msra.mxu0 %v890
        %1447 = vmatprep.subr.mxu0 0.0
        %1448 = vmatpush1.msra.mxu0 %v891
        %1449 = vmatprep.subr.mxu0 0.0
        %1450 = vmatpush1.msra.mxu0 %v892
        %1451 = vmatprep.subr.mxu0 0.0
        %1452 = vmatpush1.msra.mxu0 %v893
        %1453 = vmatprep.subr.mxu0 0.0
        %1454 = vmatpush1.msra.mxu0 %v894
        %1455 = vmatprep.subr.mxu0 0.0
        %1456 = vmatpush1.msra.mxu0 %v895
        %1457 = vmatprep.subr.mxu0 0.0
        %1458 = vmatpush1.msra.mxu0 %v896
        %1459 = vmatprep.mubr.f32.mxu0 %v662
        %1460 = vmatmul.mubr.f32.gmra.mrb[0].mxu0 %v549
        %v1461 = vpop.f32.mrb[0].mxu0
        %v1462 = vadd.f32 %v1237, %v1461
        %v1463 = vpop.f32.mrb[0].mxu0
        %1464 = vmatprep.mubr.f32.mxu0 %v664
        %1465 = vmatmul.mubr.f32.gmra.mrb[0].mxu0 %v551
        %v1466 = vpop.f32.mrb[0].mxu0
        %v1467 = vadd.f32 %v1242, %v1466
        %v1468 = vpop.f32.mrb[0].mxu0
        %1469 = vmatprep.mubr.f32.mxu0 %v667
        %1470 = vmatmul.mubr.f32.gmra.mrb[0].mxu0 %v554
        %v1471 = vpop.f32.mrb[0].mxu0
        %v1472 = vadd.f32 %v1247, %v1471
        %v1473 = vpop.f32.mrb[0].mxu0
        %1474 = vmatprep.mubr.f32.mxu0 %v669
        %1475 = vmatmul.mubr.f32.gmra.mrb[0].mxu0 %v556
        %v1476 = vpop.f32.mrb[0].mxu0
        %v1477 = vadd.f32 %v1252, %v1476
        %v1478 = vpop.f32.mrb[0].mxu0
        %1479 = vmatprep.mubr.f32.mxu0 %v672
        %1480 = vmatmul.mubr.f32.gmra.mrb[0].mxu0 %v559
        %v1481 = vpop.f32.mrb[0].mxu0
        %v1482 = vadd.f32 %v1257, %v1481
        %v1483 = vpop.f32.mrb[0].mxu0
        %1484 = vmatprep.mubr.f32.mxu0 %v674
        %1485 = vmatmul.mubr.f32.gmra.mrb[0].mxu0 %v561
        %v1486 = vpop.f32.mrb[0].mxu0
        %v1487 = vadd.f32 %v1262, %v1486
        %v1488 = vpop.f32.mrb[0].mxu0
        %1489 = vmatprep.mubr.f32.mxu0 %v677
        %1490 = vmatmul.mubr.f32.gmra.mrb[0].mxu0 %v564
        %v1491 = vpop.f32.mrb[0].mxu0
        %v1492 = vadd.f32 %v1267, %v1491
        %v1493 = vpop.f32.mrb[0].mxu0
        %1494 = vmatprep.mubr.f32.mxu0 %v679
        %1495 = vmatmul.mubr.f32.gmra.mrb[0].mxu0 %v566
        %v1496 = vpop.f32.mrb[0].mxu0
        %v1497 = vadd.f32 %v1272, %v1496
        %v1498 = vpop.f32.mrb[0].mxu0
        %1499 = vmatprep.mubr.f32.mxu0 %v682
        %1500 = vmatmul.mubr.f32.gmra.mrb[0].mxu0 %v569
        %v1501 = vpop.f32.mrb[0].mxu0
        %v1502 = vadd.f32 %v1277, %v1501
        %v1503 = vpop.f32.mrb[0].mxu0
        %1504 = vmatprep.mubr.f32.mxu0 %v684
        %1505 = vmatmul.mubr.f32.gmra.mrb[0].mxu0 %v571
        %v1506 = vpop.f32.mrb[0].mxu0
        %v1507 = vadd.f32 %v1282, %v1506
        %v1508 = vpop.f32.mrb[0].mxu0
        %1509 = vmatprep.mubr.f32.mxu0 %v687
        %1510 = vmatmul.mubr.f32.gmra.mrb[0].mxu0 %v574
        %v1511 = vpop.f32.mrb[0].mxu0
        %v1512 = vadd.f32 %v1287, %v1511
        %v1513 = vpop.f32.mrb[0].mxu0
        %1514 = vmatprep.mubr.f32.mxu0 %v689
        %1515 = vmatmul.mubr.f32.gmra.mrb[0].mxu0 %v576
        %v1516 = vpop.f32.mrb[0].mxu0
        %v1517 = vadd.f32 %v1292, %v1516
        %v1518 = vpop.f32.mrb[0].mxu0
        %1519 = vmatprep.mubr.f32.mxu0 %v692
        %1520 = vmatmul.mubr.f32.gmra.mrb[0].mxu0 %v579
        %v1521 = vpop.f32.mrb[0].mxu0
        %v1522 = vadd.f32 %v1297, %v1521
        %v1523 = vpop.f32.mrb[0].mxu0
        %1524 = vmatprep.mubr.f32.mxu0 %v694
        %1525 = vmatmul.mubr.f32.gmra.mrb[0].mxu0 %v581
        %v1526 = vpop.f32.mrb[0].mxu0
        %v1527 = vadd.f32 %v1302, %v1526
        %v1528 = vpop.f32.mrb[0].mxu0
        %1529 = vmatprep.mubr.f32.mxu0 %v697
        %1530 = vmatmul.mubr.f32.gmra.mrb[0].mxu0 %v584
        %v1531 = vpop.f32.mrb[0].mxu0
        %v1532 = vadd.f32 %v1307, %v1531
        %v1533 = vpop.f32.mrb[0].mxu0
        %1534 = vmatprep.mubr.f32.mxu0 %v699
        %1535 = vmatmul.mubr.f32.gmra.mrb[0].mxu0 %v586
        %v1536 = vpop.f32.mrb[0].mxu0
        %v1537 = vadd.f32 %v1312, %v1536
        %v1538 = vpop.f32.mrb[0].mxu0
        %1539 = vmatprep.mubr.f32.mxu0 %v702
        %1540 = vmatmul.mubr.f32.gmra.mrb[0].mxu0 %v589
        %v1541 = vpop.f32.mrb[0].mxu0
        %v1542 = vadd.f32 %v1317, %v1541
        %v1543 = vpop.f32.mrb[0].mxu0
        %1544 = vmatprep.mubr.f32.mxu0 %v704
        %1545 = vmatmul.mubr.f32.gmra.mrb[0].mxu0 %v591
        %v1546 = vpop.f32.mrb[0].mxu0
        %v1547 = vadd.f32 %v1322, %v1546
        %v1548 = vpop.f32.mrb[0].mxu0
        %1549 = vmatprep.mubr.f32.mxu0 %v707
        %1550 = vmatmul.mubr.f32.gmra.mrb[0].mxu0 %v594
        %v1551 = vpop.f32.mrb[0].mxu0
        %v1552 = vadd.f32 %v1327, %v1551
        %v1553 = vpop.f32.mrb[0].mxu0
        %1554 = vmatprep.mubr.f32.mxu0 %v709
        %1555 = vmatmul.mubr.f32.gmra.mrb[0].mxu0 %v596
        %v1556 = vpop.f32.mrb[0].mxu0
        %v1557 = vadd.f32 %v1332, %v1556
        %v1558 = vpop.f32.mrb[0].mxu0
        %1559 = vmatprep.mubr.f32.mxu0 %v712
        %1560 = vmatmul.mubr.f32.gmra.mrb[0].mxu0 %v599
        %v1561 = vpop.f32.mrb[0].mxu0
        %v1562 = vadd.f32 %v1337, %v1561
        %v1563 = vpop.f32.mrb[0].mxu0
        %1564 = vmatprep.mubr.f32.mxu0 %v714
        %1565 = vmatmul.mubr.f32.gmra.mrb[0].mxu0 %v601
        %v1566 = vpop.f32.mrb[0].mxu0
        %v1567 = vadd.f32 %v1342, %v1566
        %v1568 = vpop.f32.mrb[0].mxu0
        %1569 = vmatprep.mubr.f32.mxu0 %v717
        %1570 = vmatmul.mubr.f32.gmra.mrb[0].mxu0 %v604
        %v1571 = vpop.f32.mrb[0].mxu0
        %v1572 = vadd.f32 %v1347, %v1571
        %v1573 = vpop.f32.mrb[0].mxu0
        %1574 = vmatprep.mubr.f32.mxu0 %v719
        %1575 = vmatmul.mubr.f32.gmra.mrb[0].mxu0 %v606
        %v1576 = vpop.f32.mrb[0].mxu0
        %v1577 = vadd.f32 %v1352, %v1576
        %v1578 = vpop.f32.mrb[0].mxu0
        %1579 = vmatprep.mubr.f32.mxu0 %v722
        %1580 = vmatmul.mubr.f32.gmra.mrb[0].mxu0 %v609
        %v1581 = vpop.f32.mrb[0].mxu0
        %v1582 = vadd.f32 %v1357, %v1581
        %v1583 = vpop.f32.mrb[0].mxu0
        %1584 = vmatprep.mubr.f32.mxu0 %v724
        %1585 = vmatmul.mubr.f32.gmra.mrb[0].mxu0 %v611
        %v1586 = vpop.f32.mrb[0].mxu0
        %v1587 = vadd.f32 %v1362, %v1586
        %v1588 = vpop.f32.mrb[0].mxu0
        %1589 = vmatprep.mubr.f32.mxu0 %v727
        %1590 = vmatmul.mubr.f32.gmra.mrb[0].mxu0 %v614
        %v1591 = vpop.f32.mrb[0].mxu0
        %v1592 = vadd.f32 %v1367, %v1591
        %v1593 = vpop.f32.mrb[0].mxu0
        %1594 = vmatprep.mubr.f32.mxu0 %v729
        %1595 = vmatmul.mubr.f32.gmra.mrb[0].mxu0 %v616
        %v1596 = vpop.f32.mrb[0].mxu0
        %v1597 = vadd.f32 %v1372, %v1596
        %v1598 = vpop.f32.mrb[0].mxu0
        %1599 = vmatprep.mubr.f32.mxu0 %v732
        %1600 = vmatmul.mubr.f32.gmra.mrb[0].mxu0 %v619
        %v1601 = vpop.f32.mrb[0].mxu0
        %v1602 = vadd.f32 %v1377, %v1601
        %v1603 = vpop.f32.mrb[0].mxu0
        %1604 = vmatprep.mubr.f32.mxu0 %v734
        %1605 = vmatmul.mubr.f32.gmra.mrb[0].mxu0 %v621
        %v1606 = vpop.f32.mrb[0].mxu0
        %v1607 = vadd.f32 %v1382, %v1606
        %v1608 = vpop.f32.mrb[0].mxu0
        %1609 = vmatprep.mubr.f32.mxu0 %v779
        %1610 = vmatmul.mubr.f32.gmra.mrb[0].mxu0 %v772
        %v1611 = vpop.f32.mrb[0].mxu0
        %v1612 = vadd.f32 %v1387, %v1611
        %v1613 = vpop.f32.mrb[0].mxu0
        %1614 = vmatprep.mubr.f32.mxu0 %v781
        %1615 = vmatmul.mubr.f32.gmra.mrb[0].mxu0 %v774
        %v1616 = vpop.f32.mrb[0].mxu0
        %v1617 = vadd.f32 %v1392, %v1616
        %v1618 = vpop.f32.mrb[0].mxu0
        %1619 = vdwg.mxu0
        %1620 = vmatprep.subr.mxu0 0.0
        %1621 = vmatpush1.msra.mxu0 %v897
        %1622 = vmatprep.subr.mxu0 0.0
        %1623 = vmatpush1.msra.mxu0 %v898
        %1624 = vmatprep.subr.mxu0 0.0
        %1625 = vmatpush1.msra.mxu0 %v899
        %1626 = vmatprep.subr.mxu0 0.0
        %1627 = vmatpush1.msra.mxu0 %v900
        %1628 = vmatprep.subr.mxu0 0.0
        %1629 = vmatpush1.msra.mxu0 %v901
        %1630 = vmatprep.subr.mxu0 0.0
        %1631 = vmatpush1.msra.mxu0 %v902
        %1632 = vmatprep.subr.mxu0 0.0
        %1633 = vmatpush1.msra.mxu0 %v903
        %1634 = vmatprep.subr.mxu0 0.0
        %1635 = vmatpush1.msra.mxu0 %v904
        %1636 = vmatprep.subr.mxu0 0.0
        %1637 = vmatpush1.msra.mxu0 %v905
        %1638 = vmatprep.subr.mxu0 0.0
        %1639 = vmatpush1.msra.mxu0 %v906
        %1640 = vmatprep.subr.mxu0 0.0
        %1641 = vmatpush1.msra.mxu0 %v907
        %1642 = vmatprep.subr.mxu0 0.0
        %1643 = vmatpush1.msra.mxu0 %v908
        %1644 = vmatprep.subr.mxu0 0.0
        %1645 = vmatpush1.msra.mxu0 %v909
        %1646 = vmatprep.subr.mxu0 0.0
        %1647 = vmatpush1.msra.mxu0 %v910
        %1648 = vmatprep.subr.mxu0 0.0
        %1649 = vmatpush1.msra.mxu0 %v911
        %1650 = vmatprep.subr.mxu0 0.0
        %1651 = vmatpush1.msra.mxu0 %v912
        %1652 = vmatprep.subr.mxu0 0.0
        %1653 = vmatpush1.msra.mxu0 %v913
        %1654 = vmatprep.subr.mxu0 0.0
        %1655 = vmatpush1.msra.mxu0 %v914
        %1656 = vmatprep.subr.mxu0 0.0
        %1657 = vmatpush1.msra.mxu0 %v915
        %1658 = vmatprep.subr.mxu0 0.0
        %1659 = vmatpush1.msra.mxu0 %v916
        %1660 = vmatprep.subr.mxu0 0.0
        %1661 = vmatpush1.msra.mxu0 %v917
        %1662 = vmatprep.subr.mxu0 0.0
        %1663 = vmatpush1.msra.mxu0 %v918
        %1664 = vmatprep.subr.mxu0 0.0
        %1665 = vmatpush1.msra.mxu0 %v919
        %1666 = vmatprep.subr.mxu0 0.0
        %1667 = vmatpush1.msra.mxu0 %v920
        %1668 = vmatprep.subr.mxu0 0.0
        %1669 = vmatpush1.msra.mxu0 %v921
        %1670 = vmatprep.subr.mxu0 0.0
        %1671 = vmatpush1.msra.mxu0 %v922
        %1672 = vmatprep.subr.mxu0 0.0
        %1673 = vmatpush1.msra.mxu0 %v923
        %1674 = vmatprep.subr.mxu0 0.0
        %1675 = vmatpush1.msra.mxu0 %v924
        %1676 = vmatprep.subr.mxu0 0.0
        %1677 = vmatpush1.msra.mxu0 %v925
        %1678 = vmatprep.subr.mxu0 0.0
        %1679 = vmatpush1.msra.mxu0 %v926
        %1680 = vmatprep.subr.mxu0 0.0
        %1681 = vmatpush1.msra.mxu0 %v927
        %1682 = vmatprep.subr.mxu0 0.0
        %1683 = vmatpush1.msra.mxu0 %v928
        %1684 = vmatprep.mubr.f32.mxu0 %v554
        %1685 = vmatmul.mubr.f32.gmra.mrb[0].mxu0 %v445
        %v1686 = vpop.f32.mrb[0].mxu0
        %v1687 = vadd.f32 %v1462, %v1686
        %v1688 = vpop.f32.mrb[0].mxu0
        %1689 = vmatprep.mubr.f32.mxu0 %v556
        %1690 = vmatmul.mubr.f32.gmra.mrb[0].mxu0 %v446
        %v1691 = vpop.f32.mrb[0].mxu0
        %v1692 = vadd.f32 %v1467, %v1691
        %v1693 = vpop.f32.mrb[0].mxu0
        %1694 = vmatprep.mubr.f32.mxu0 %v559
        %1695 = vmatmul.mubr.f32.gmra.mrb[0].mxu0 %v448
        %v1696 = vpop.f32.mrb[0].mxu0
        %v1697 = vadd.f32 %v1472, %v1696
        %v1698 = vpop.f32.mrb[0].mxu0
        %1699 = vmatprep.mubr.f32.mxu0 %v561
        %1700 = vmatmul.mubr.f32.gmra.mrb[0].mxu0 %v449
        %v1701 = vpop.f32.mrb[0].mxu0
        %v1702 = vadd.f32 %v1477, %v1701
        %v1703 = vpop.f32.mrb[0].mxu0
        %1704 = vmatprep.mubr.f32.mxu0 %v564
        %1705 = vmatmul.mubr.f32.gmra.mrb[0].mxu0 %v451
        %v1706 = vpop.f32.mrb[0].mxu0
        %v1707 = vadd.f32 %v1482, %v1706
        %v1708 = vpop.f32.mrb[0].mxu0
        %1709 = vmatprep.mubr.f32.mxu0 %v566
        %1710 = vmatmul.mubr.f32.gmra.mrb[0].mxu0 %v452
        %v1711 = vpop.f32.mrb[0].mxu0
        %v1712 = vadd.f32 %v1487, %v1711
        %v1713 = vpop.f32.mrb[0].mxu0
        %1714 = vmatprep.mubr.f32.mxu0 %v569
        %1715 = vmatmul.mubr.f32.gmra.mrb[0].mxu0 %v454
        %v1716 = vpop.f32.mrb[0].mxu0
        %v1717 = vadd.f32 %v1492, %v1716
        %v1718 = vpop.f32.mrb[0].mxu0
        %1719 = vmatprep.mubr.f32.mxu0 %v571
        %1720 = vmatmul.mubr.f32.gmra.mrb[0].mxu0 %v455
        %v1721 = vpop.f32.mrb[0].mxu0
        %v1722 = vadd.f32 %v1497, %v1721
        %v1723 = vpop.f32.mrb[0].mxu0
        %1724 = vmatprep.mubr.f32.mxu0 %v574
        %1725 = vmatmul.mubr.f32.gmra.mrb[0].mxu0 %v457
        %v1726 = vpop.f32.mrb[0].mxu0
        %v1727 = vadd.f32 %v1502, %v1726
        %v1728 = vpop.f32.mrb[0].mxu0
        %1729 = vmatprep.mubr.f32.mxu0 %v576
        %1730 = vmatmul.mubr.f32.gmra.mrb[0].mxu0 %v458
        %v1731 = vpop.f32.mrb[0].mxu0
        %v1732 = vadd.f32 %v1507, %v1731
        %v1733 = vpop.f32.mrb[0].mxu0
        %1734 = vmatprep.mubr.f32.mxu0 %v579
        %1735 = vmatmul.mubr.f32.gmra.mrb[0].mxu0 %v460
        %v1736 = vpop.f32.mrb[0].mxu0
        %v1737 = vadd.f32 %v1512, %v1736
        %v1738 = vpop.f32.mrb[0].mxu0
        %1739 = vmatprep.mubr.f32.mxu0 %v581
        %1740 = vmatmul.mubr.f32.gmra.mrb[0].mxu0 %v461
        %v1741 = vpop.f32.mrb[0].mxu0
        %v1742 = vadd.f32 %v1517, %v1741
        %v1743 = vpop.f32.mrb[0].mxu0
        %1744 = vmatprep.mubr.f32.mxu0 %v584
        %1745 = vmatmul.mubr.f32.gmra.mrb[0].mxu0 %v463
        %v1746 = vpop.f32.mrb[0].mxu0
        %v1747 = vadd.f32 %v1522, %v1746
        %v1748 = vpop.f32.mrb[0].mxu0
        %1749 = vmatprep.mubr.f32.mxu0 %v586
        %1750 = vmatmul.mubr.f32.gmra.mrb[0].mxu0 %v464
        %v1751 = vpop.f32.mrb[0].mxu0
        %v1752 = vadd.f32 %v1527, %v1751
        %v1753 = vpop.f32.mrb[0].mxu0
        %1754 = vmatprep.mubr.f32.mxu0 %v589
        %1755 = vmatmul.mubr.f32.gmra.mrb[0].mxu0 %v466
        %v1756 = vpop.f32.mrb[0].mxu0
        %v1757 = vadd.f32 %v1532, %v1756
        %v1758 = vpop.f32.mrb[0].mxu0
        %1759 = vmatprep.mubr.f32.mxu0 %v591
        %1760 = vmatmul.mubr.f32.gmra.mrb[0].mxu0 %v467
        %v1761 = vpop.f32.mrb[0].mxu0
        %v1762 = vadd.f32 %v1537, %v1761
        %v1763 = vpop.f32.mrb[0].mxu0
        %1764 = vmatprep.mubr.f32.mxu0 %v594
        %1765 = vmatmul.mubr.f32.gmra.mrb[0].mxu0 %v469
        %v1766 = vpop.f32.mrb[0].mxu0
        %v1767 = vadd.f32 %v1542, %v1766
        %v1768 = vpop.f32.mrb[0].mxu0
        %1769 = vmatprep.mubr.f32.mxu0 %v596
        %1770 = vmatmul.mubr.f32.gmra.mrb[0].mxu0 %v470
        %v1771 = vpop.f32.mrb[0].mxu0
        %v1772 = vadd.f32 %v1547, %v1771
        %v1773 = vpop.f32.mrb[0].mxu0
        %1774 = vmatprep.mubr.f32.mxu0 %v599
        %1775 = vmatmul.mubr.f32.gmra.mrb[0].mxu0 %v472
        %v1776 = vpop.f32.mrb[0].mxu0
        %v1777 = vadd.f32 %v1552, %v1776
        %v1778 = vpop.f32.mrb[0].mxu0
        %1779 = vmatprep.mubr.f32.mxu0 %v601
        %1780 = vmatmul.mubr.f32.gmra.mrb[0].mxu0 %v473
        %v1781 = vpop.f32.mrb[0].mxu0
        %v1782 = vadd.f32 %v1557, %v1781
        %v1783 = vpop.f32.mrb[0].mxu0
        %1784 = vmatprep.mubr.f32.mxu0 %v604
        %1785 = vmatmul.mubr.f32.gmra.mrb[0].mxu0 %v475
        %v1786 = vpop.f32.mrb[0].mxu0
        %v1787 = vadd.f32 %v1562, %v1786
        %v1788 = vpop.f32.mrb[0].mxu0
        %1789 = vmatprep.mubr.f32.mxu0 %v606
        %1790 = vmatmul.mubr.f32.gmra.mrb[0].mxu0 %v476
        %v1791 = vpop.f32.mrb[0].mxu0
        %v1792 = vadd.f32 %v1567, %v1791
        %v1793 = vpop.f32.mrb[0].mxu0
        %1794 = vmatprep.mubr.f32.mxu0 %v609
        %1795 = vmatmul.mubr.f32.gmra.mrb[0].mxu0 %v478
        %v1796 = vpop.f32.mrb[0].mxu0
        %v1797 = vadd.f32 %v1572, %v1796
        %v1798 = vpop.f32.mrb[0].mxu0
        %1799 = vmatprep.mubr.f32.mxu0 %v611
        %1800 = vmatmul.mubr.f32.gmra.mrb[0].mxu0 %v479
        %v1801 = vpop.f32.mrb[0].mxu0
        %v1802 = vadd.f32 %v1577, %v1801
        %v1803 = vpop.f32.mrb[0].mxu0
        %1804 = vmatprep.mubr.f32.mxu0 %v614
        %1805 = vmatmul.mubr.f32.gmra.mrb[0].mxu0 %v481
        %v1806 = vpop.f32.mrb[0].mxu0
        %v1807 = vadd.f32 %v1582, %v1806
        %v1808 = vpop.f32.mrb[0].mxu0
        %1809 = vmatprep.mubr.f32.mxu0 %v616
        %1810 = vmatmul.mubr.f32.gmra.mrb[0].mxu0 %v482
        %v1811 = vpop.f32.mrb[0].mxu0
        %v1812 = vadd.f32 %v1587, %v1811
        %v1813 = vpop.f32.mrb[0].mxu0
        %1814 = vmatprep.mubr.f32.mxu0 %v619
        %1815 = vmatmul.mubr.f32.gmra.mrb[0].mxu0 %v484
        %v1816 = vpop.f32.mrb[0].mxu0
        %v1817 = vadd.f32 %v1592, %v1816
        %v1818 = vpop.f32.mrb[0].mxu0
        %1819 = vmatprep.mubr.f32.mxu0 %v621
        %1820 = vmatmul.mubr.f32.gmra.mrb[0].mxu0 %v485
        %v1821 = vpop.f32.mrb[0].mxu0
        %v1822 = vadd.f32 %v1597, %v1821
        %v1823 = vpop.f32.mrb[0].mxu0
        %1824 = vmatprep.mubr.f32.mxu0 %v772
        %1825 = vmatmul.mubr.f32.gmra.mrb[0].mxu0 %v487
        %v1826 = vpop.f32.mrb[0].mxu0
        %v1827 = vadd.f32 %v1602, %v1826
        %v1828 = vpop.f32.mrb[0].mxu0
        %1829 = vmatprep.mubr.f32.mxu0 %v774
        %1830 = vmatmul.mubr.f32.gmra.mrb[0].mxu0 %v488
        %v1831 = vpop.f32.mrb[0].mxu0
        %v1832 = vadd.f32 %v1607, %v1831
        %v1833 = vpop.f32.mrb[0].mxu0
        %1834 = vmatprep.mubr.f32.mxu0 %v789
        %1835 = vmatmul.mubr.f32.gmra.mrb[0].mxu0 %v490
        %v1836 = vpop.f32.mrb[0].mxu0
        %v1837 = vadd.f32 %v1612, %v1836
        %v1838 = vpop.f32.mrb[0].mxu0
        %1839 = vmatprep.mubr.f32.mxu0 %v791
        %1840 = vmatmul.mubr.f32.gmra.mrb[0].mxu0 %v491
        %v1841 = vpop.f32.mrb[0].mxu0
        %v1842 = vadd.f32 %v1617, %v1841
        %v1843 = vpop.f32.mrb[0].mxu0
        %1844 = vdwg.mxu0
        %1845 = vmatprep.subr.mxu0 0.0
        %1846 = vmatpush1.msra.mxu0 %v929
        %1847 = vmatprep.subr.mxu0 0.0
        %1848 = vmatpush1.msra.mxu0 %v930
        %1849 = vmatprep.subr.mxu0 0.0
        %1850 = vmatpush1.msra.mxu0 %v931
        %1851 = vmatprep.subr.mxu0 0.0
        %1852 = vmatpush1.msra.mxu0 %v932
        %1853 = vmatprep.subr.mxu0 0.0
        %1854 = vmatpush1.msra.mxu0 %v933
        %1855 = vmatprep.subr.mxu0 0.0
        %1856 = vmatpush1.msra.mxu0 %v934
        %1857 = vmatprep.subr.mxu0 0.0
        %1858 = vmatpush1.msra.mxu0 %v935
        %1859 = vmatprep.subr.mxu0 0.0
        %1860 = vmatpush1.msra.mxu0 %v936
        %1861 = vmatprep.subr.mxu0 0.0
        %1862 = vmatpush1.msra.mxu0 %v937
        %1863 = vmatprep.subr.mxu0 0.0
        %1864 = vmatpush1.msra.mxu0 %v938
        %1865 = vmatprep.subr.mxu0 0.0
        %1866 = vmatpush1.msra.mxu0 %v939
        %1867 = vmatprep.subr.mxu0 0.0
        %1868 = vmatpush1.msra.mxu0 %v940
        %1869 = vmatprep.subr.mxu0 0.0
        %1870 = vmatpush1.msra.mxu0 %v941
        %1871 = vmatprep.subr.mxu0 0.0
        %1872 = vmatpush1.msra.mxu0 %v942
        %1873 = vmatprep.subr.mxu0 0.0
        %1874 = vmatpush1.msra.mxu0 %v943
        %1875 = vmatprep.subr.mxu0 0.0
        %1876 = vmatpush1.msra.mxu0 %v944
        %1877 = vmatprep.subr.mxu0 0.0
        %1878 = vmatpush1.msra.mxu0 0.0
        %1879 = vmatprep.subr.mxu0 0.0
        %1880 = vmatpush1.msra.mxu0 0.0
        %1881 = vmatprep.subr.mxu0 0.0
        %1882 = vmatpush1.msra.mxu0 0.0
        %1883 = vmatprep.subr.mxu0 0.0
        %1884 = vmatpush1.msra.mxu0 0.0
        %1885 = vmatprep.subr.mxu0 0.0
        %1886 = vmatpush1.msra.mxu0 0.0
        %1887 = vmatprep.subr.mxu0 0.0
        %1888 = vmatpush1.msra.mxu0 0.0
        %1889 = vmatprep.subr.mxu0 0.0
        %1890 = vmatpush1.msra.mxu0 0.0
        %1891 = vmatprep.subr.mxu0 0.0
        %1892 = vmatpush1.msra.mxu0 0.0
        %1893 = vmatprep.subr.mxu0 0.0
        %1894 = vmatpush1.msra.mxu0 0.0
        %1895 = vmatprep.subr.mxu0 0.0
        %1896 = vmatpush1.msra.mxu0 0.0
        %1897 = vmatprep.subr.mxu0 0.0
        %1898 = vmatpush1.msra.mxu0 0.0
        %1899 = vmatprep.subr.mxu0 0.0
        %1900 = vmatpush1.msra.mxu0 0.0
        %1901 = vmatprep.subr.mxu0 0.0
        %1902 = vmatpush1.msra.mxu0 0.0
        %1903 = vmatprep.subr.mxu0 0.0
        %1904 = vmatpush1.msra.mxu0 0.0
        %1905 = vmatprep.subr.mxu0 0.0
        %1906 = vmatpush1.msra.mxu0 0.0
        %1907 = vmatprep.subr.mxu0 0.0
        %1908 = vmatpush1.msra.mxu0 0.0
        %1909 = vmatprep.mubr.f32.mxu0 0.0
        %1910 = vmatmul.mubr.f32.gmra.mrb[0].mxu0 %v667
        %v1911 = vpop.f32.mrb[0].mxu0
        %v1912 = vadd.f32 %v1687, %v1911
        %v1913 = vpop.f32.mrb[0].mxu0
        %1914 = vmatprep.mubr.f32.mxu0 0.0
        %1915 = vmatmul.mubr.f32.gmra.mrb[0].mxu0 %v669
        %v1916 = vpop.f32.mrb[0].mxu0
        %v1917 = vadd.f32 %v1692, %v1916
        %v1918 = vpop.f32.mrb[0].mxu0
        %1919 = vmatprep.mubr.f32.mxu0 0.0
        %1920 = vmatmul.mubr.f32.gmra.mrb[0].mxu0 %v672
        %v1921 = vpop.f32.mrb[0].mxu0
        %v1922 = vadd.f32 %v1697, %v1921
        %v1923 = vpop.f32.mrb[0].mxu0
        %1924 = vmatprep.mubr.f32.mxu0 0.0
        %1925 = vmatmul.mubr.f32.gmra.mrb[0].mxu0 %v674
        %v1926 = vpop.f32.mrb[0].mxu0
        %v1927 = vadd.f32 %v1702, %v1926
        %v1928 = vpop.f32.mrb[0].mxu0
        %1929 = vmatprep.mubr.f32.mxu0 0.0
        %1930 = vmatmul.mubr.f32.gmra.mrb[0].mxu0 %v677
        %v1931 = vpop.f32.mrb[0].mxu0
        %v1932 = vadd.f32 %v1707, %v1931
        %v1933 = vpop.f32.mrb[0].mxu0
        %1934 = vmatprep.mubr.f32.mxu0 0.0
        %1935 = vmatmul.mubr.f32.gmra.mrb[0].mxu0 %v679
        %v1936 = vpop.f32.mrb[0].mxu0
        %v1937 = vadd.f32 %v1712, %v1936
        %v1938 = vpop.f32.mrb[0].mxu0
        %1939 = vmatprep.mubr.f32.mxu0 0.0
        %1940 = vmatmul.mubr.f32.gmra.mrb[0].mxu0 %v682
        %v1941 = vpop.f32.mrb[0].mxu0
        %v1942 = vadd.f32 %v1717, %v1941
        %v1943 = vpop.f32.mrb[0].mxu0
        %1944 = vmatprep.mubr.f32.mxu0 0.0
        %1945 = vmatmul.mubr.f32.gmra.mrb[0].mxu0 %v684
        %v1946 = vpop.f32.mrb[0].mxu0
        %v1947 = vadd.f32 %v1722, %v1946
        %v1948 = vpop.f32.mrb[0].mxu0
        %1949 = vmatprep.mubr.f32.mxu0 0.0
        %1950 = vmatmul.mubr.f32.gmra.mrb[0].mxu0 %v687
        %v1951 = vpop.f32.mrb[0].mxu0
        %v1952 = vadd.f32 %v1727, %v1951
        %v1953 = vpop.f32.mrb[0].mxu0
        %1954 = vmatprep.mubr.f32.mxu0 0.0
        %1955 = vmatmul.mubr.f32.gmra.mrb[0].mxu0 %v689
        %v1956 = vpop.f32.mrb[0].mxu0
        %v1957 = vadd.f32 %v1732, %v1956
        %v1958 = vpop.f32.mrb[0].mxu0
        %1959 = vmatprep.mubr.f32.mxu0 0.0
        %1960 = vmatmul.mubr.f32.gmra.mrb[0].mxu0 %v692
        %v1961 = vpop.f32.mrb[0].mxu0
        %v1962 = vadd.f32 %v1737, %v1961
        %v1963 = vpop.f32.mrb[0].mxu0
        %1964 = vmatprep.mubr.f32.mxu0 0.0
        %1965 = vmatmul.mubr.f32.gmra.mrb[0].mxu0 %v694
        %v1966 = vpop.f32.mrb[0].mxu0
        %v1967 = vadd.f32 %v1742, %v1966
        %v1968 = vpop.f32.mrb[0].mxu0
        %1969 = vmatprep.mubr.f32.mxu0 0.0
        %1970 = vmatmul.mubr.f32.gmra.mrb[0].mxu0 %v697
        %v1971 = vpop.f32.mrb[0].mxu0
        %v1972 = vadd.f32 %v1747, %v1971
        %v1973 = vpop.f32.mrb[0].mxu0
        %1974 = vmatprep.mubr.f32.mxu0 0.0
        %1975 = vmatmul.mubr.f32.gmra.mrb[0].mxu0 %v699
        %v1976 = vpop.f32.mrb[0].mxu0
        %v1977 = vadd.f32 %v1752, %v1976
        %v1978 = vpop.f32.mrb[0].mxu0
        %1979 = vmatprep.mubr.f32.mxu0 0.0
        %1980 = vmatmul.mubr.f32.gmra.mrb[0].mxu0 %v702
        %v1981 = vpop.f32.mrb[0].mxu0
        %v1982 = vadd.f32 %v1757, %v1981
        %v1983 = vpop.f32.mrb[0].mxu0
        %1984 = vmatprep.mubr.f32.mxu0 0.0
        %1985 = vmatmul.mubr.f32.gmra.mrb[0].mxu0 %v704
        %v1986 = vpop.f32.mrb[0].mxu0
        %v1987 = vadd.f32 %v1762, %v1986
        %v1988 = vpop.f32.mrb[0].mxu0
        %1989 = vmatprep.mubr.f32.mxu0 0.0
        %1990 = vmatmul.mubr.f32.gmra.mrb[0].mxu0 %v707
        %v1991 = vpop.f32.mrb[0].mxu0
        %v1992 = vadd.f32 %v1767, %v1991
        %v1993 = vpop.f32.mrb[0].mxu0
        %1994 = vmatprep.mubr.f32.mxu0 0.0
        %1995 = vmatmul.mubr.f32.gmra.mrb[0].mxu0 %v709
        %v1996 = vpop.f32.mrb[0].mxu0
        %v1997 = vadd.f32 %v1772, %v1996
        %v1998 = vpop.f32.mrb[0].mxu0
        %1999 = vmatprep.mubr.f32.mxu0 0.0
        %2000 = vmatmul.mubr.f32.gmra.mrb[0].mxu0 %v712
        %v2001 = vpop.f32.mrb[0].mxu0
        %v2002 = vadd.f32 %v1777, %v2001
        %v2003 = vpop.f32.mrb[0].mxu0
        %2004 = vmatprep.mubr.f32.mxu0 0.0
        %2005 = vmatmul.mubr.f32.gmra.mrb[0].mxu0 %v714
        %v2006 = vpop.f32.mrb[0].mxu0
        %v2007 = vadd.f32 %v1782, %v2006
        %v2008 = vpop.f32.mrb[0].mxu0
        %2009 = vmatprep.mubr.f32.mxu0 0.0
        %2010 = vmatmul.mubr.f32.gmra.mrb[0].mxu0 %v717
        %v2011 = vpop.f32.mrb[0].mxu0
        %v2012 = vadd.f32 %v1787, %v2011
        %v2013 = vpop.f32.mrb[0].mxu0
        %2014 = vmatprep.mubr.f32.mxu0 0.0
        %2015 = vmatmul.mubr.f32.gmra.mrb[0].mxu0 %v719
        %v2016 = vpop.f32.mrb[0].mxu0
        %v2017 = vadd.f32 %v1792, %v2016
        %v2018 = vpop.f32.mrb[0].mxu0
        %2019 = vmatprep.mubr.f32.mxu0 0.0
        %2020 = vmatmul.mubr.f32.gmra.mrb[0].mxu0 %v722
        %v2021 = vpop.f32.mrb[0].mxu0
        %v2022 = vadd.f32 %v1797, %v2021
        %v2023 = vpop.f32.mrb[0].mxu0
        %2024 = vmatprep.mubr.f32.mxu0 0.0
        %2025 = vmatmul.mubr.f32.gmra.mrb[0].mxu0 %v724
        %v2026 = vpop.f32.mrb[0].mxu0
        %v2027 = vadd.f32 %v1802, %v2026
        %v2028 = vpop.f32.mrb[0].mxu0
        %2029 = vmatprep.mubr.f32.mxu0 0.0
        %2030 = vmatmul.mubr.f32.gmra.mrb[0].mxu0 %v727
        %v2031 = vpop.f32.mrb[0].mxu0
        %v2032 = vadd.f32 %v1807, %v2031
        %v2033 = vpop.f32.mrb[0].mxu0
        %2034 = vmatprep.mubr.f32.mxu0 0.0
        %2035 = vmatmul.mubr.f32.gmra.mrb[0].mxu0 %v729
        %v2036 = vpop.f32.mrb[0].mxu0
        %v2037 = vadd.f32 %v1812, %v2036
        %v2038 = vpop.f32.mrb[0].mxu0
        %2039 = vmatprep.mubr.f32.mxu0 0.0
        %2040 = vmatmul.mubr.f32.gmra.mrb[0].mxu0 %v732
        %v2041 = vpop.f32.mrb[0].mxu0
        %v2042 = vadd.f32 %v1817, %v2041
        %v2043 = vpop.f32.mrb[0].mxu0
        %2044 = vmatprep.mubr.f32.mxu0 0.0
        %2045 = vmatmul.mubr.f32.gmra.mrb[0].mxu0 %v734
        %v2046 = vpop.f32.mrb[0].mxu0
        %v2047 = vadd.f32 %v1822, %v2046
        %v2048 = vpop.f32.mrb[0].mxu0
        %2049 = vmatprep.mubr.f32.mxu0 0.0
        %2050 = vmatmul.mubr.f32.gmra.mrb[0].mxu0 %v779
        %v2051 = vpop.f32.mrb[0].mxu0
        %v2052 = vadd.f32 %v1827, %v2051
        %v2053 = vpop.f32.mrb[0].mxu0
        %2054 = vmatprep.mubr.f32.mxu0 0.0
        %2055 = vmatmul.mubr.f32.gmra.mrb[0].mxu0 %v781
        %v2056 = vpop.f32.mrb[0].mxu0
        %v2057 = vadd.f32 %v1832, %v2056
        %v2058 = vpop.f32.mrb[0].mxu0
        %2059 = vmatprep.mubr.f32.mxu0 0.0
        %2060 = vmatmul.mubr.f32.gmra.mrb[0].mxu0 %v796
        %v2061 = vpop.f32.mrb[0].mxu0
        %v2062 = vadd.f32 %v1837, %v2061
        %v2063 = vpop.f32.mrb[0].mxu0
        %2064 = vmatprep.mubr.f32.mxu0 0.0
        %2065 = vmatmul.mubr.f32.gmra.mrb[0].mxu0 %v798
        %v2066 = vpop.f32.mrb[0].mxu0
        %v2067 = vadd.f32 %v1842, %v2066
        %v2068 = vpop.f32.mrb[0].mxu0
        %2069 = vdwg.mxu0
        %v2070 = vld [vmem:[%s259] sm:$0x1]
        %v2072 = vlaneseq
        %v2073 = vshrl.u32 %v2072, 7
        %v2074 = vsub.s32 0, %v2073
        %v2075 = vrot.slane %v2070, %v2074
        %v2077 = vmul.f32 %v1912, %v2075
        %v2078 = vmul.f32 %v1917, %v2075
        %v2079 = vmul.f32 %v1922, %v2075
        %v2080 = vmul.f32 %v1927, %v2075
        %v2081 = vmul.f32 %v1932, %v2075
        %v2082 = vmul.f32 %v1937, %v2075
        %v2083 = vmul.f32 %v1942, %v2075
        %v2084 = vmul.f32 %v1947, %v2075
        %v2085 = vmul.f32 %v1952, %v2075
        %v2086 = vmul.f32 %v1957, %v2075
        %v2087 = vmul.f32 %v1962, %v2075
        %v2088 = vmul.f32 %v1967, %v2075
        %v2089 = vmul.f32 %v1972, %v2075
        %v2090 = vmul.f32 %v1977, %v2075
        %v2091 = vmul.f32 %v1982, %v2075
        %v2092 = vmul.f32 %v1987, %v2075
        %v2093 = vmul.f32 %v1992, %v2075
        %v2094 = vmul.f32 %v1997, %v2075
        %v2095 = vmul.f32 %v2002, %v2075
        %v2096 = vmul.f32 %v2007, %v2075
        %v2097 = vmul.f32 %v2012, %v2075
        %v2098 = vmul.f32 %v2017, %v2075
        %v2099 = vmul.f32 %v2022, %v2075
        %v2100 = vmul.f32 %v2027, %v2075
        %v2101 = vmul.f32 %v2032, %v2075
        %v2102 = vmul.f32 %v2037, %v2075
        %v2103 = vmul.f32 %v2042, %v2075
        %v2104 = vmul.f32 %v2047, %v2075
        %v2105 = vmul.f32 %v2052, %v2075
        %v2106 = vmul.f32 %v2057, %v2075
        %v2107 = vmul.f32 %v2062, %v2075
        %v2108 = vmul.f32 %v2067, %v2075
        %v2109 = vld [vmem:[%s267] sm:$0x1]
        %v2111 = vlaneseq
        %v2112 = vshrl.u32 %v2111, 7
        %v2113 = vsub.s32 0, %v2112
        %v2114 = vrot.slane %v2109, %v2113
        %v2116 = vadd.f32 %v2077, %v2114
        %v2117 = vadd.f32 %v2078, %v2114
        %v2118 = vadd.f32 %v2079, %v2114
        %v2119 = vadd.f32 %v2080, %v2114
        %v2120 = vadd.f32 %v2081, %v2114
        %v2121 = vadd.f32 %v2082, %v2114
        %v2122 = vadd.f32 %v2083, %v2114
        %v2123 = vadd.f32 %v2084, %v2114
        %v2124 = vadd.f32 %v2085, %v2114
        %v2125 = vadd.f32 %v2086, %v2114
        %v2126 = vadd.f32 %v2087, %v2114
        %v2127 = vadd.f32 %v2088, %v2114
        %v2128 = vadd.f32 %v2089, %v2114
        %v2129 = vadd.f32 %v2090, %v2114
        %v2130 = vadd.f32 %v2091, %v2114
        %v2131 = vadd.f32 %v2092, %v2114
        %v2132 = vadd.f32 %v2093, %v2114
        %v2133 = vadd.f32 %v2094, %v2114
        %v2134 = vadd.f32 %v2095, %v2114
        %v2135 = vadd.f32 %v2096, %v2114
        %v2136 = vadd.f32 %v2097, %v2114
        %v2137 = vadd.f32 %v2098, %v2114
        %v2138 = vadd.f32 %v2099, %v2114
        %v2139 = vadd.f32 %v2100, %v2114
        %v2140 = vadd.f32 %v2101, %v2114
        %v2141 = vadd.f32 %v2102, %v2114
        %v2142 = vadd.f32 %v2103, %v2114
        %v2143 = vadd.f32 %v2104, %v2114
        %v2144 = vadd.f32 %v2105, %v2114
        %v2145 = vadd.f32 %v2106, %v2114
        %v2146 = vadd.f32 %v2107, %v2114
        %v2147 = vadd.f32 %v2108, %v2114
        %p2148 = scmp.lt.s32.totalorder %s26, 3
        // Predicated region
        $region53: #{tpu_custom_call.1} parent=35 // pred_check
          %p2149 = pneg %p2148
        $region54: #{tpu_custom_call.1} parent=35 // pred_check_branch
          %2151 = sbr.rel (%p2149) target = $region56
        $region55: #{tpu_custom_call.1} parent=35 // pred_region
          %v2152 = vmax.f32 %v2116, 0.0
          %v2153 = vmax.f32 %v2117, 0.0
          %v2154 = vmax.f32 %v2118, 0.0
          %v2155 = vmax.f32 %v2119, 0.0
          %v2156 = vmax.f32 %v2120, 0.0
          %v2157 = vmax.f32 %v2121, 0.0
          %v2158 = vmax.f32 %v2122, 0.0
          %v2159 = vmax.f32 %v2123, 0.0
          %v2160 = vmax.f32 %v2124, 0.0
          %v2161 = vmax.f32 %v2125, 0.0
          %v2162 = vmax.f32 %v2126, 0.0
          %v2163 = vmax.f32 %v2127, 0.0
          %v2164 = vmax.f32 %v2128, 0.0
          %v2165 = vmax.f32 %v2129, 0.0
          %v2166 = vmax.f32 %v2130, 0.0
          %v2167 = vmax.f32 %v2131, 0.0
          %v2168 = vmax.f32 %v2132, 0.0
          %v2169 = vmax.f32 %v2133, 0.0
          %v2170 = vmax.f32 %v2134, 0.0
          %v2171 = vmax.f32 %v2135, 0.0
          %v2172 = vmax.f32 %v2136, 0.0
          %v2173 = vmax.f32 %v2137, 0.0
          %v2174 = vmax.f32 %v2138, 0.0
          %v2175 = vmax.f32 %v2139, 0.0
          %v2176 = vmax.f32 %v2140, 0.0
          %v2177 = vmax.f32 %v2141, 0.0
          %v2178 = vmax.f32 %v2142, 0.0
          %v2179 = vmax.f32 %v2143, 0.0
          %v2180 = vmax.f32 %v2144, 0.0
          %v2181 = vmax.f32 %v2145, 0.0
          %v2182 = vmax.f32 %v2146, 0.0
          %v2183 = vmax.f32 %v2147, 0.0
          %s2184 = scalar_lea.vmem [#allocation2], 24
          %2185 = vst [vmem:[%s2184 + $0x1] sm:$0xff] %v2152
          %2186 = vst [vmem:[%s2184 + $0x9] sm:$0xff] %v2153
          %2187 = vst [vmem:[%s2184 + $0x19] sm:$0xff] %v2154
          %2188 = vst [vmem:[%s2184 + $0x21] sm:$0xff] %v2155
          %2189 = vst [vmem:[%s2184 + $0x31] sm:$0xff] %v2156
          %2190 = vst [vmem:[%s2184 + $0x39] sm:$0xff] %v2157
          %2191 = vst [vmem:[%s2184 + $0x49] sm:$0xff] %v2158
          %2192 = vst [vmem:[%s2184 + $0x51] sm:$0xff] %v2159
          %2193 = vst [vmem:[%s2184 + $0x61] sm:$0xff] %v2160
          %2194 = vst [vmem:[%s2184 + $0x69] sm:$0xff] %v2161
          %2195 = vst [vmem:[%s2184 + $0x79] sm:$0xff] %v2162
          %2196 = vst [vmem:[%s2184 + $0x81] sm:$0xff] %v2163
          %2197 = vst [vmem:[%s2184 + $0x91] sm:$0xff] %v2164
          %2198 = vst [vmem:[%s2184 + $0x99] sm:$0xff] %v2165
          %2199 = vst [vmem:[%s2184 + $0xa9] sm:$0xff] %v2166
          %2200 = vst [vmem:[%s2184 + $0xb1] sm:$0xff] %v2167
          %2201 = vst [vmem:[%s2184 + $0xc1] sm:$0xff] %v2168
          %2202 = vst [vmem:[%s2184 + $0xc9] sm:$0xff] %v2169
          %2203 = vst [vmem:[%s2184 + $0xd9] sm:$0xff] %v2170
          %2204 = vst [vmem:[%s2184 + $0xe1] sm:$0xff] %v2171
          %2205 = vst [vmem:[%s2184 + $0xf1] sm:$0xff] %v2172
          %2206 = vst [vmem:[%s2184 + $0xf9] sm:$0xff] %v2173
          %2207 = vst [vmem:[%s2184 + $0x109] sm:$0xff] %v2174
          %2208 = vst [vmem:[%s2184 + $0x111] sm:$0xff] %v2175
          %2209 = vst [vmem:[%s2184 + $0x121] sm:$0xff] %v2176
          %2210 = vst [vmem:[%s2184 + $0x129] sm:$0xff] %v2177
          %2211 = vst [vmem:[%s2184 + $0x139] sm:$0xff] %v2178
          %2212 = vst [vmem:[%s2184 + $0x141] sm:$0xff] %v2179
          %2213 = vst [vmem:[%s2184 + $0x151] sm:$0xff] %v2180
          %2214 = vst [vmem:[%s2184 + $0x159] sm:$0xff] %v2181
          %2215 = vst [vmem:[%s2184 + $0x169] sm:$0xff] %v2182
          %2216 = vst [vmem:[%s2184 + $0x171] sm:$0xff] %v2183
        $region56: #{tpu_custom_call.1} parent=35 // pred_fallthru
          _
        %p2217 = scmp.eq.s32.totalorder %s26, 3
        // Predicated region
        $region57: #{tpu_custom_call.1} parent=35 // pred_check
          %p2218 = pneg %p2217
        $region58: #{tpu_custom_call.1} parent=35 // pred_check_branch
          %2220 = sbr.rel (%p2218) target = $region60
        $region59: #{tpu_custom_call.1} parent=35 // pred_region
          %vm2221 = vcmask 7168
          %2222 = vst.msk [vmem:[%s314] sm:$0xff] %vm2221, %v2116
          %2223 = vst.msk [vmem:[%s314 + $0x8] sm:$0xff] %vm2221, %v2117
          %2224 = vst.msk [vmem:[%s314 + $0x10] sm:$0xff] %vm2221, %v2118
          %2225 = vst.msk [vmem:[%s314 + $0x18] sm:$0xff] %vm2221, %v2119
          %2226 = vst.msk [vmem:[%s314 + $0x20] sm:$0xff] %vm2221, %v2120
          %2227 = vst.msk [vmem:[%s314 + $0x28] sm:$0xff] %vm2221, %v2121
          %2228 = vst.msk [vmem:[%s314 + $0x30] sm:$0xff] %vm2221, %v2122
          %2229 = vst.msk [vmem:[%s314 + $0x38] sm:$0xff] %vm2221, %v2123
          %2230 = vst.msk [vmem:[%s314 + $0x40] sm:$0xff] %vm2221, %v2124
          %2231 = vst.msk [vmem:[%s314 + $0x48] sm:$0xff] %vm2221, %v2125
          %2232 = vst.msk [vmem:[%s314 + $0x50] sm:$0xff] %vm2221, %v2126
          %2233 = vst.msk [vmem:[%s314 + $0x58] sm:$0xff] %vm2221, %v2127
          %2234 = vst.msk [vmem:[%s314 + $0x60] sm:$0xff] %vm2221, %v2128
          %2235 = vst.msk [vmem:[%s314 + $0x68] sm:$0xff] %vm2221, %v2129
          %2236 = vst.msk [vmem:[%s314 + $0x70] sm:$0xff] %vm2221, %v2130
          %2237 = vst.msk [vmem:[%s314 + $0x78] sm:$0xff] %vm2221, %v2131
          %2238 = vst.msk [vmem:[%s314 + $0x80] sm:$0xff] %vm2221, %v2132
          %2239 = vst.msk [vmem:[%s314 + $0x88] sm:$0xff] %vm2221, %v2133
          %2240 = vst.msk [vmem:[%s314 + $0x90] sm:$0xff] %vm2221, %v2134
          %2241 = vst.msk [vmem:[%s314 + $0x98] sm:$0xff] %vm2221, %v2135
          %2242 = vst.msk [vmem:[%s314 + $0xa0] sm:$0xff] %vm2221, %v2136
          %2243 = vst.msk [vmem:[%s314 + $0xa8] sm:$0xff] %vm2221, %v2137
          %2244 = vst.msk [vmem:[%s314 + $0xb0] sm:$0xff] %vm2221, %v2138
          %2245 = vst.msk [vmem:[%s314 + $0xb8] sm:$0xff] %vm2221, %v2139
          %2246 = vst.msk [vmem:[%s314 + $0xc0] sm:$0xff] %vm2221, %v2140
          %2247 = vst.msk [vmem:[%s314 + $0xc8] sm:$0xff] %vm2221, %v2141
          %2248 = vst.msk [vmem:[%s314 + $0xd0] sm:$0xff] %vm2221, %v2142
          %2249 = vst.msk [vmem:[%s314 + $0xd8] sm:$0xff] %vm2221, %v2143
          %2250 = vst.msk [vmem:[%s314 + $0xe0] sm:$0xff] %vm2221, %v2144
          %2251 = vst.msk [vmem:[%s314 + $0xe8] sm:$0xff] %vm2221, %v2145
          %2252 = vst.msk [vmem:[%s314 + $0xf0] sm:$0xff] %vm2221, %v2146
          %2253 = vst.msk [vmem:[%s314 + $0xf8] sm:$0xff] %vm2221, %v2147
        $region60: #{tpu_custom_call.1} parent=35 // pred_fallthru
          _
        %p2254 = scmp.lt.s32.totalorder %s25, 1
        %s2255 = scalar_select %p2254, %s25, 1
        %s2256 = smul.addr %s2255, 32
        %s2257 = smul.addr %s2256, 8
        %s2258 = scalar_lea.vmem %s4, %s2257
        // Predicated region
        $region61: #{tpu_custom_call.1} parent=35 // pred_check
          %p2259 = pneg %p155
        $region62: #{tpu_custom_call.1} parent=35 // pred_check_branch
          %2261 = sbr.rel (%p2259) target = $region64
        $region63: #{tpu_custom_call.1} parent=35 // pred_region
          _
        $region64: #{tpu_custom_call.1} parent=35 // pred_fallthru
          _
      $region36: #{tpu_custom_call.1} parent=5 // pred_fallthru
        _
      %p2262 = scmp.le.s32.totalorder 2, %s16
      // Predicated region
      $region65: #{tpu_custom_call.1} parent=5 // pred_check
        %p2263 = pneg %p2262
      $region66: #{tpu_custom_call.1} parent=5 // pred_check_branch
        %2265 = sbr.rel (%p2263) target = $region68
      $region67: #{tpu_custom_call.1} parent=5 // pred_region
        %s2266 = ssub.s32 %s16, 2
        // Predicated region
        $region69: #{tpu_custom_call.1} parent=67 // pred_check
          %p2267 = pneg %p161
        $region70: #{tpu_custom_call.1} parent=67 // pred_check_branch
          %2269 = sbr.rel (%p2267) target = $region72
        $region71: #{tpu_custom_call.1} parent=67 // pred_region
          %p2270 = scmp.lt.s32.totalorder %s27, 1
          %s2271 = scalar_select %p2270, %s27, 1
          %s2272 = smul.addr %s2271, 32
          %s2273 = smul.addr %s2272, 8
          %s2274 = scalar_lea.vmem %s4, %s2273
        $region72: #{tpu_custom_call.1} parent=67 // pred_fallthru
          _
      $region68: #{tpu_custom_call.1} parent=5 // pred_fallthru
        _
    $region6: #{tpu_custom_call.1} parent=1 // loop_footer
      %s20 = sadd.s32 1, %s16
    $region7: #{tpu_custom_call.1} parent=1 // loop_footer_branch
      %15 = sbr.rel target = $region3
    $region8: #{tpu_custom_call.1} parent=1 // loop_exit
      _
    %2275 = vsyncpa [#allocation4], 1
    %s2276 = scalar_lea.sflag [#allocation4], 1
    %2277 = vsyncpa %s2276, 1
    %2278 = vsyncpa [#allocation6], 1
    %s2279 = scalar_lea.sflag [#allocation6], 1
    %2280 = vsyncpa %s2279, 1

</llo_original>
